<compile_context>
chip_gen: v6e
topology: v6e:2x2x1
jax: 0.10.0
libtpu: 0.0.40
codegen_flags: <defaults>
</compile_context>

<pallas_src>
import functools
import math

import jax
import jax.numpy as jnp
import numpy as np
from jax.experimental import pallas as pl
from jax.experimental.pallas import tpu as pltpu

LANE = 128
POOL_ROWS = 5          # AdaptiveAvgPool2d target rows
POOL_ROWS_PAD = 8      # padded to sublane multiple for dense stores


# ----------------------------- Pallas kernel ------------------------------ #

def _seqclr_kernel(patches_ref, w_ref, mpool_ref, pcht_ref, out_ref, *, G, HW):
    """One grid step handles G samples:
         conv-as-matmul (bias folded into K) + ReLU    [bf16 in, f32 acc]
         -> per-sample (height-mean o adaptive seq-pool) matmul
         -> adaptive channel-pool matmul."""
    x = patches_ref[...]                                           # (G*HW, K+1) bf16
    f = jnp.dot(x, w_ref[...], preferred_element_type=jnp.float32)  # (G*HW, hid_p)
    f = jnp.maximum(f, 0.0).astype(jnp.bfloat16)

    mp = mpool_ref[...]                                            # (8, HW) bf16
    pooled = [
        jnp.dot(mp, f[g * HW:(g + 1) * HW, :],
                preferred_element_type=jnp.float32)                # (8, hid_p) f32
        for g in range(G)
    ]
    pooled = jnp.concatenate(pooled, axis=0).astype(jnp.bfloat16)  # (G*8, hid_p)

    out_ref[...] = jnp.dot(pooled, pcht_ref[...],
                           preferred_element_type=jnp.float32)     # (G*8, proj_p)


# ------------------------------ JAX glue ----------------------------------- #

def _im2col_3x3(x):
    """x: (N, C, H, W) NCHW -> patches (N, H*W, C*9); 3x3, pad=1, stride=1.
    Row ordering is row-major (h*W + w); column ordering is c*9 + (kh*3+kw)."""
    N, C, H, W = x.shape
    xp = jnp.pad(x, ((0, 0), (0, 0), (1, 1), (1, 1)))
    cols = [xp[:, :, kh:kh + H, kw:kw + W] for kh in range(3) for kw in range(3)]
    patches = jnp.stack(cols, axis=2)                              # (N, C, 9, H, W)
    return patches.transpose(0, 3, 4, 1, 2).reshape(N, H * W, C * 9)


def _adaptive_pool_matrix(in_size, out_size):
    """Row-stochastic matrix reproducing nn.AdaptiveAvgPool1d's bin rule."""
    m = np.zeros((out_size, in_size), dtype=np.float32)
    for i in range(out_size):
        s = math.floor(i * in_size / out_size)
        e = math.ceil((i + 1) * in_size / out_size)
        m[i, s:e] = 1.0 / (e - s)
    return m


def _height_mean_matrix(H, W):
    """(W, H*W) matrix: seq_feat[w] = mean_h conv_out[h*W + w]."""
    m = np.zeros((W, H * W), dtype=np.float32)
    for h in range(H):
        m[np.arange(W), h * W + np.arange(W)] = 1.0 / H
    return m


def _sample_pool_matrix(H, W):
    """Per-sample fused pooling matrix (POOL_ROWS_PAD, H*W):
    rows 0..4 = Pseq(5,W) @ Hmean(W,H*W), rows 5..7 zero (sublane padding)."""
    m1 = _adaptive_pool_matrix(W, POOL_ROWS) @ _height_mean_matrix(H, W)
    out = np.zeros((POOL_ROWS_PAD, H * W), dtype=np.float32)
    out[:POOL_ROWS] = m1
    return out


def _round_up(x, m):
    return ((x + m - 1) // m) * m


def _num_tensorcores():
    """2 TensorCores per chip on v7x, 1 on v5e/v6e (conservative default 1)."""
    try:
        kind = getattr(jax.devices()[0], "device_kind", "").lower()
        if "v7" in kind:
            return 2
    except Exception:
        pass
    return 1


def _pick_group(n, hw, n_cores, max_rows_per_step=4096):
    """Samples per grid step.  Single-TC chips: one fat step over the whole
    batch (per-step overhead dominates).  Multi-TC (v7x): keep >= n_cores
    'parallel' steps while maximizing the per-core tile."""
    best = 1
    for cand in range(1, n + 1):
        if n % cand != 0:
            continue
        if cand * hw > max_rows_per_step:
            continue
        if n_cores > 1 and n > 1 and (n // cand) < n_cores:
            continue
        best = cand
    return best


def seqclr_forward(images, params, *, H, W, hidden, proj):
    """images: (B, 2, C, H, W).  Returns (proj_view0, proj_view1), each
    (B, 5, proj) float32 — same semantics as the reference forward."""
    B, n_views, C = images.shape[0], images.shape[1], images.shape[2]
    assert n_views == 2
    N = 2 * B
    HW = H * W
    K = C * 9
    K1 = K + 1                       # +1 column of ones carries the bias
    hid_p = _round_up(hidden, LANE)
    proj_p = _round_up(proj, LANE)

    n_cores = _num_tensorcores()
    G = _pick_group(N, HW, n_cores)
    n_steps = N // G

    # Order samples as (view, batch) so the two projection outputs split cleanly.
    views = jnp.swapaxes(images, 0, 1).reshape(N, C, H, W)

    # im2col once for all views; append a ones column (bias); NO lane padding
    # in HBM (Mosaic pads in VMEM) -> ~3.5x less patch HBM traffic.
    patches = _im2col_3x3(views)                                   # (N, HW, K)
    ones = jnp.ones((N, HW, 1), patches.dtype)
    patches = jnp.concatenate([patches, ones], axis=-1)            # (N, HW, K1)
    patches = patches.reshape(N * HW, K1).astype(jnp.bfloat16)

    # Weights: pad hidden to lane width, fold bias as the last K row. bf16 MXU.
    w = jnp.pad(params["w"], ((0, 0), (0, hid_p - hidden)))
    b = jnp.pad(params["b"].reshape(1, -1), ((0, 0), (0, hid_p - hidden)))
    w = jnp.concatenate([w, b], axis=0).astype(jnp.bfloat16)       # (K1, hid_p)

    # Pooling matrices (constants, resident across grid steps), bf16.
    mpool = jnp.asarray(_sample_pool_matrix(H, W)).astype(jnp.bfloat16)   # (8, HW)
    pcht = jnp.pad(params["pcht"],
                   ((0, hid_p - hidden), (0, proj_p - proj))).astype(jnp.bfloat16)

    flops = (2 * N * HW * K1 * hid_p
             + 2 * N * POOL_ROWS_PAD * HW * hid_p
             + 2 * N * POOL_ROWS_PAD * hid_p * proj_p)
    bytes_accessed = (patches.size * 2 + w.size * 2 + mpool.size * 2
                      + pcht.size * 2 + N * POOL_ROWS_PAD * proj_p * 4)

    out = pl.pallas_call(
        functools.partial(_seqclr_kernel, G=G, HW=HW),
        out_shape=jax.ShapeDtypeStruct((N * POOL_ROWS_PAD, proj_p), jnp.float32),
        grid=(n_steps,),
        in_specs=[
            pl.BlockSpec((G * HW, K1), lambda i: (i, 0)),             # patches
            pl.BlockSpec((K1, hid_p), lambda i: (0, 0)),              # conv W (+bias)
            pl.BlockSpec((POOL_ROWS_PAD, HW), lambda i: (0, 0)),      # seq pool
            pl.BlockSpec((hid_p, proj_p), lambda i: (0, 0)),          # chan pool
        ],
        out_specs=pl.BlockSpec((G * POOL_ROWS_PAD, proj_p), lambda i: (i, 0)),
        compiler_params=pltpu.CompilerParams(
            dimension_semantics=("parallel",),
            vmem_limit_bytes=32 * 1024 * 1024),
        cost_estimate=pl.CostEstimate(flops=flops, transcendentals=0,
                                      bytes_accessed=bytes_accessed),
    )(patches, w, mpool, pcht)

    out = out.reshape(2, B, POOL_ROWS_PAD, proj_p)[:, :, :POOL_ROWS, :proj]
    return out[0], out[1]


# --------------------------- pure-JAX reference ----------------------------- #

def _reference_forward(images, params, *, H, W, hidden, proj):
    """Float32 reference of the same forward (conv3x3+ReLU, mean over H,
    AdaptiveAvgPool2d((5, proj)))."""
    B, _, C = images.shape[0], images.shape[1], images.shape[2]
    N = 2 * B
    views = jnp.swapaxes(images, 0, 1).reshape(N, C, H, W)
    patches = _im2col_3x3(views)                                     # (N, HW, K)
    f = jnp.maximum(patches @ params["w"] + params["b"].reshape(1, 1, -1), 0.0)
    f = f.reshape(N, H, W, hidden).mean(axis=1)                      # (N, W, hidden)
    pseq = jnp.asarray(_adaptive_pool_matrix(W, POOL_ROWS))          # (5, W)
    out = jnp.einsum("pw,nwh,hq->npq", pseq, f, params["pcht"])      # (N, 5, proj)
    out = out.reshape(2, B, POOL_ROWS, proj)
    return out[0], out[1]


# --------------------------------- main ------------------------------------ #

if __name__ == "__main__":
    B, C_IN, H, W = 2, 4, 16, 16
    HIDDEN = 32          # encoder output channels (sequence feature dim)
    PROJ = 16            # opt.projection_input_channel

    key = jax.random.PRNGKey(0)
    k_img, k_w, k_b = jax.random.split(key, 3)

    # Two augmented views per sample, NCHW each view.
    images = jax.random.normal(k_img, (B, 2, C_IN, H, W), dtype=jnp.float32)

    # Deterministic synthetic encoder parameters (PyTorch conv weight layout
    # (out, in, kh, kw) flattened to a (Cin*9, hidden) matmul weight).
    fan_in = C_IN * 9
    w_conv = jax.random.normal(k_w, (HIDDEN, C_IN, 3, 3), dtype=jnp.float32)
    w_conv = w_conv * (1.0 / math.sqrt(fan_in))
    w_mat = w_conv.reshape(HIDDEN, fan_in).T                        # (Cin*9, hidden)
    b_vec = (jax.random.normal(k_b, (HIDDEN,), dtype=jnp.float32)
             * (1.0 / math.sqrt(fan_in)))

    params = {
        "w": w_mat,
        "b": b_vec,
        "pcht": jnp.asarray(_adaptive_pool_matrix(HIDDEN, PROJ).T),  # (hidden, proj)
    }

    fwd = jax.jit(functools.partial(seqclr_forward, H=H, W=W,
                                    hidden=HIDDEN, proj=PROJ))
    out0, out1 = fwd(images, params)
    jax.block_until_ready((out0, out1))

    assert out0.shape == (B, 5, PROJ) and out1.shape == (B, 5, PROJ)
    assert out0.dtype == jnp.float32 and out1.dtype == jnp.float32

    # Relaxed-tolerance check vs f32 reference (kernel runs bf16 MXU inputs).
    ref0, ref1 = _reference_forward(images, params, H=H, W=W,
                                    hidden=HIDDEN, proj=PROJ)
    err = max(float(jnp.max(jnp.abs(out0 - ref0))),
              float(jnp.max(jnp.abs(out1 - ref1))))
    assert err < 0.1, f"max abs error vs reference: {err}"

    print("KERNEL_OK")
</pallas_src>

<mosaic_0001>
module attributes {stable_mosaic.version = 11 : i64} {
  func.func @_seqclr_kernel(%arg0: i32, %arg1: memref<1024x37xbf16, #tpu.memory_space<vmem>>, %arg2: memref<37x128xbf16, #tpu.memory_space<vmem>>, %arg3: memref<8x256xbf16, #tpu.memory_space<vmem>>, %arg4: memref<128x128xbf16, #tpu.memory_space<vmem>>, %arg5: memref<32x128xf32, #tpu.memory_space<vmem>>) attributes {dimension_semantics = [#tpu.dimension_semantics<parallel>], iteration_bounds = array<i64: 1>, scalar_prefetch = 0 : i64, scratch_operands = 0 : i64, tpu.core_type = #tpu.core_type<tc>, window_params = [{transform_indices = @transform_0, window_bounds = array<i64: 1024, 37>}, {pipeline_mode = #tpu.pipeline_mode<synchronous>, transform_indices = @transform_1, window_bounds = array<i64: 37, 128>}, {pipeline_mode = #tpu.pipeline_mode<synchronous>, transform_indices = @transform_2, window_bounds = array<i64: 8, 256>}, {pipeline_mode = #tpu.pipeline_mode<synchronous>, transform_indices = @transform_3, window_bounds = array<i64: 128, 128>}, {transform_indices = @transform_4, window_bounds = array<i64: 32, 128>}]} {
    %c0 = arith.constant 0 : index
    %c0_0 = arith.constant 0 : index
    %0 = vector.load %arg1[%c0, %c0_0] : memref<1024x37xbf16, #tpu.memory_space<vmem>>, vector<1024x37xbf16>
    %c0_1 = arith.constant 0 : index
    %c0_2 = arith.constant 0 : index
    %1 = vector.load %arg2[%c0_1, %c0_2] : memref<37x128xbf16, #tpu.memory_space<vmem>>, vector<37x128xbf16>
    %cst = arith.constant dense<0.000000e+00> : vector<1024x128xf32>
    %2 = tpu.matmul %0, %1, %cst {dimension_numbers = #tpu.dot_dimension_numbers<[1], [0], [0], [1], [0, 0, 1, 1], [], []>} : vector<1024x37xbf16>, vector<37x128xbf16>, vector<1024x128xf32> -> vector<1024x128xf32>
    %cst_3 = arith.constant 0.000000e+00 : f32
    %3 = vector.broadcast %cst_3 : f32 to vector<1024x128xf32>
    %4 = arith.maximumf %2, %3 : vector<1024x128xf32>
    %5 = arith.truncf %4 : vector<1024x128xf32> to vector<1024x128xbf16>
    %c0_4 = arith.constant 0 : index
    %c0_5 = arith.constant 0 : index
    %6 = vector.load %arg3[%c0_4, %c0_5] : memref<8x256xbf16, #tpu.memory_space<vmem>>, vector<8x256xbf16>
    %7 = vector.extract_strided_slice %5 {offsets = [0, 0], sizes = [256, 128], strides = [1, 1]} : vector<1024x128xbf16> to vector<256x128xbf16>
    %cst_6 = arith.constant dense<0.000000e+00> : vector<8x128xf32>
    %8 = tpu.matmul %6, %7, %cst_6 {dimension_numbers = #tpu.dot_dimension_numbers<[1], [0], [0], [1], [0, 0, 1, 1], [], []>} : vector<8x256xbf16>, vector<256x128xbf16>, vector<8x128xf32> -> vector<8x128xf32>
    %9 = vector.extract_strided_slice %5 {offsets = [256, 0], sizes = [256, 128], strides = [1, 1]} : vector<1024x128xbf16> to vector<256x128xbf16>
    %cst_7 = arith.constant dense<0.000000e+00> : vector<8x128xf32>
    %10 = tpu.matmul %6, %9, %cst_7 {dimension_numbers = #tpu.dot_dimension_numbers<[1], [0], [0], [1], [0, 0, 1, 1], [], []>} : vector<8x256xbf16>, vector<256x128xbf16>, vector<8x128xf32> -> vector<8x128xf32>
    %11 = vector.extract_strided_slice %5 {offsets = [512, 0], sizes = [256, 128], strides = [1, 1]} : vector<1024x128xbf16> to vector<256x128xbf16>
    %cst_8 = arith.constant dense<0.000000e+00> : vector<8x128xf32>
    %12 = tpu.matmul %6, %11, %cst_8 {dimension_numbers = #tpu.dot_dimension_numbers<[1], [0], [0], [1], [0, 0, 1, 1], [], []>} : vector<8x256xbf16>, vector<256x128xbf16>, vector<8x128xf32> -> vector<8x128xf32>
    %13 = vector.extract_strided_slice %5 {offsets = [768, 0], sizes = [256, 128], strides = [1, 1]} : vector<1024x128xbf16> to vector<256x128xbf16>
    %cst_9 = arith.constant dense<0.000000e+00> : vector<8x128xf32>
    %14 = tpu.matmul %6, %13, %cst_9 {dimension_numbers = #tpu.dot_dimension_numbers<[1], [0], [0], [1], [0, 0, 1, 1], [], []>} : vector<8x256xbf16>, vector<256x128xbf16>, vector<8x128xf32> -> vector<8x128xf32>
    %15 = tpu.concatenate %8, %10, %12, %14 in 0 : vector<8x128xf32>, vector<8x128xf32>, vector<8x128xf32>, vector<8x128xf32> -> vector<32x128xf32>
    %16 = arith.truncf %15 : vector<32x128xf32> to vector<32x128xbf16>
    %c0_10 = arith.constant 0 : index
    %c0_11 = arith.constant 0 : index
    %17 = vector.load %arg4[%c0_10, %c0_11] : memref<128x128xbf16, #tpu.memory_space<vmem>>, vector<128x128xbf16>
    %cst_12 = arith.constant dense<0.000000e+00> : vector<32x128xf32>
    %18 = tpu.matmul %16, %17, %cst_12 {dimension_numbers = #tpu.dot_dimension_numbers<[1], [0], [0], [1], [0, 0, 1, 1], [], []>} : vector<32x128xbf16>, vector<128x128xbf16>, vector<32x128xf32> -> vector<32x128xf32>
    %c0_13 = arith.constant 0 : index
    %c0_14 = arith.constant 0 : index
    %19 = vector.load %arg5[%c0_13, %c0_14] : memref<32x128xf32, #tpu.memory_space<vmem>>, vector<32x128xf32>
    tpu.vector_store %arg5[%c0_13, %c0_14], %18 {strides = array<i32>} : memref<32x128xf32, #tpu.memory_space<vmem>>, vector<32x128xf32>,
    return
  }
  func.func @transform_0(%arg0: i32) -> (i32, i32) {
    %c0_i32 = arith.constant 0 : i32
    %c0_i32_0 = arith.constant 0 : i32
    return %arg0, %c0_i32 : i32, i32
  }
  func.func @transform_1(%arg0: i32) -> (i32, i32) {
    %c0_i32 = arith.constant 0 : i32
    %c0_i32_0 = arith.constant 0 : i32
    %c0_i32_1 = arith.constant 0 : i32
    return %c0_i32, %c0_i32_0 : i32, i32
  }
  func.func @transform_2(%arg0: i32) -> (i32, i32) {
    %c0_i32 = arith.constant 0 : i32
    %c0_i32_0 = arith.constant 0 : i32
    %c0_i32_1 = arith.constant 0 : i32
    return %c0_i32, %c0_i32_0 : i32, i32
  }
  func.func @transform_3(%arg0: i32) -> (i32, i32) {
    %c0_i32 = arith.constant 0 : i32
    %c0_i32_0 = arith.constant 0 : i32
    %c0_i32_1 = arith.constant 0 : i32
    return %c0_i32, %c0_i32_0 : i32, i32
  }
  func.func @transform_4(%arg0: i32) -> (i32, i32) {
    %c0_i32 = arith.constant 0 : i32
    %c0_i32_0 = arith.constant 0 : i32
    return %arg0, %c0_i32 : i32, i32
  }
}

</mosaic_0001>

<llo_original>
// kernel: seqclr_forward.1
$region0: #{seqclr_forward.1}
  #allocation0 [shape = 'u32[]', space=smem, size = 0x4, offset = 0x4, fixed_abs, tag = 'smem constant byte address 0x4 - core index']
  #allocation1 [shape = 'u32[144,128]{1,0:T(1,128)}', space=vmem, size = 0x12000, scoped, tag = 'internal scratch']
  %s0 = inlined_call_operand.vmem [shape: bf16[1024,37], index: 0, kind: input, shape index: {}]
  %s1 = inlined_call_operand.vmem [shape: bf16[37,128], index: 1, kind: input, shape index: {}]
  %s2 = inlined_call_operand.vmem [shape: bf16[8,256], index: 2, kind: input, shape index: {}]
  %s3 = inlined_call_operand.vmem [shape: bf16[128,128], index: 3, kind: input, shape index: {}]
  %s4 = inlined_call_operand.vmem [shape: f32[32,128], index: 4, kind: output, shape index: {}]
  %s5 = sld [smem:[#allocation0]]
  $region26: #{seqclr_forward.1} parent=0
    _
  %s7 = ssub.s32 1, %s5
  %s8 = scalar_select 0, %s7, %s5
  // Predicated region
  $region2: #{seqclr_forward.1} parent=0 // pred_check
    _
  $region3: #{seqclr_forward.1} parent=0 // pred_check_branch
    %10 = sbr.rel (0) target = $region5
  $region4: #{seqclr_forward.1} parent=0 // pred_region
    _
  $region5: #{seqclr_forward.1} parent=0 // pred_fallthru
    _
  // Predicated region
  $region6: #{seqclr_forward.1} parent=0 // pred_check
    _
  $region7: #{seqclr_forward.1} parent=0 // pred_check_branch
    %12 = sbr.rel (0) target = $region9
  $region8: #{seqclr_forward.1} parent=0 // pred_region
    _
  $region9: #{seqclr_forward.1} parent=0 // pred_fallthru
    _
  // Predicated region
  $region10: #{seqclr_forward.1} parent=0 // pred_check
    _
  $region11: #{seqclr_forward.1} parent=0 // pred_check_branch
    %14 = sbr.rel (0) target = $region13
  $region12: #{seqclr_forward.1} parent=0 // pred_region
    _
  $region13: #{seqclr_forward.1} parent=0 // pred_fallthru
    _
  // Predicated region
  $region14: #{seqclr_forward.1} parent=0 // pred_check
    _
  $region15: #{seqclr_forward.1} parent=0 // pred_check_branch
    %16 = sbr.rel (0) target = $region17
  $region16: #{seqclr_forward.1} parent=0 // pred_region
    _
  $region17: #{seqclr_forward.1} parent=0 // pred_fallthru
    _
  %v18 = vld [vmem:[%s0] sm:$0xf]
  %v19 = vld [vmem:[%s0 + $0x4] sm:$0xf]
  %v20 = vld [vmem:[%s0 + $0x8] sm:$0xf]
  %v21 = vld [vmem:[%s0 + $0xc] sm:$0xf]
  %v22 = vld [vmem:[%s0 + $0x10] sm:$0xf]
  %v23 = vld [vmem:[%s0 + $0x14] sm:$0xf]
  %v24 = vld [vmem:[%s0 + $0x18] sm:$0xf]
  %v25 = vld [vmem:[%s0 + $0x1c] sm:$0xf]
  %v26 = vld [vmem:[%s0 + $0x20] sm:$0xf]
  %v27 = vld [vmem:[%s0 + $0x24] sm:$0xf]
  %v28 = vld [vmem:[%s0 + $0x28] sm:$0xf]
  %v29 = vld [vmem:[%s0 + $0x2c] sm:$0xf]
  %v30 = vld [vmem:[%s0 + $0x30] sm:$0xf]
  %v31 = vld [vmem:[%s0 + $0x34] sm:$0xf]
  %v32 = vld [vmem:[%s0 + $0x38] sm:$0xf]
  %v33 = vld [vmem:[%s0 + $0x3c] sm:$0xf]
  %v34 = vld [vmem:[%s0 + $0x40] sm:$0xf]
  %v35 = vld [vmem:[%s0 + $0x44] sm:$0xf]
  %v36 = vld [vmem:[%s0 + $0x48] sm:$0xf]
  %v37 = vld [vmem:[%s0 + $0x4c] sm:$0xf]
  %v38 = vld [vmem:[%s0 + $0x50] sm:$0xf]
  %v39 = vld [vmem:[%s0 + $0x54] sm:$0xf]
  %v40 = vld [vmem:[%s0 + $0x58] sm:$0xf]
  %v41 = vld [vmem:[%s0 + $0x5c] sm:$0xf]
  %v42 = vld [vmem:[%s0 + $0x60] sm:$0xf]
  %v43 = vld [vmem:[%s0 + $0x64] sm:$0xf]
  %v44 = vld [vmem:[%s0 + $0x68] sm:$0xf]
  %v45 = vld [vmem:[%s0 + $0x6c] sm:$0xf]
  %v46 = vld [vmem:[%s0 + $0x70] sm:$0xf]
  %v47 = vld [vmem:[%s0 + $0x74] sm:$0xf]
  %v48 = vld [vmem:[%s0 + $0x78] sm:$0xf]
  %v49 = vld [vmem:[%s0 + $0x7c] sm:$0xf]
  %v50 = vld [vmem:[%s0 + $0x80] sm:$0xf]
  %v51 = vld [vmem:[%s0 + $0x84] sm:$0xf]
  %v52 = vld [vmem:[%s0 + $0x88] sm:$0xf]
  %v53 = vld [vmem:[%s0 + $0x8c] sm:$0xf]
  %v54 = vld [vmem:[%s0 + $0x90] sm:$0xf]
  %v55 = vld [vmem:[%s0 + $0x94] sm:$0xf]
  %v56 = vld [vmem:[%s0 + $0x98] sm:$0xf]
  %v57 = vld [vmem:[%s0 + $0x9c] sm:$0xf]
  %v58 = vld [vmem:[%s0 + $0xa0] sm:$0xf]
  %v59 = vld [vmem:[%s0 + $0xa4] sm:$0xf]
  %v60 = vld [vmem:[%s0 + $0xa8] sm:$0xf]
  %v61 = vld [vmem:[%s0 + $0xac] sm:$0xf]
  %v62 = vld [vmem:[%s0 + $0xb0] sm:$0xf]
  %v63 = vld [vmem:[%s0 + $0xb4] sm:$0xf]
  %v64 = vld [vmem:[%s0 + $0xb8] sm:$0xf]
  %v65 = vld [vmem:[%s0 + $0xbc] sm:$0xf]
  %v66 = vld [vmem:[%s0 + $0xc0] sm:$0xf]
  %v67 = vld [vmem:[%s0 + $0xc4] sm:$0xf]
  %v68 = vld [vmem:[%s0 + $0xc8] sm:$0xf]
  %v69 = vld [vmem:[%s0 + $0xcc] sm:$0xf]
  %v70 = vld [vmem:[%s0 + $0xd0] sm:$0xf]
  %v71 = vld [vmem:[%s0 + $0xd4] sm:$0xf]
  %v72 = vld [vmem:[%s0 + $0xd8] sm:$0xf]
  %v73 = vld [vmem:[%s0 + $0xdc] sm:$0xf]
  %v74 = vld [vmem:[%s0 + $0xe0] sm:$0xf]
  %v75 = vld [vmem:[%s0 + $0xe4] sm:$0xf]
  %v76 = vld [vmem:[%s0 + $0xe8] sm:$0xf]
  %v77 = vld [vmem:[%s0 + $0xec] sm:$0xf]
  %v78 = vld [vmem:[%s0 + $0xf0] sm:$0xf]
  %v79 = vld [vmem:[%s0 + $0xf4] sm:$0xf]
  %v80 = vld [vmem:[%s0 + $0xf8] sm:$0xf]
  %v81 = vld [vmem:[%s0 + $0xfc] sm:$0xf]
  %v82 = vld [vmem:[%s0 + $0x100] sm:$0xf]
  %v83 = vld [vmem:[%s0 + $0x104] sm:$0xf]
  %v84 = vld [vmem:[%s0 + $0x108] sm:$0xf]
  %v85 = vld [vmem:[%s0 + $0x10c] sm:$0xf]
  %v86 = vld [vmem:[%s0 + $0x110] sm:$0xf]
  %v87 = vld [vmem:[%s0 + $0x114] sm:$0xf]
  %v88 = vld [vmem:[%s0 + $0x118] sm:$0xf]
  %v89 = vld [vmem:[%s0 + $0x11c] sm:$0xf]
  %v90 = vld [vmem:[%s0 + $0x120] sm:$0xf]
  %v91 = vld [vmem:[%s0 + $0x124] sm:$0xf]
  %v92 = vld [vmem:[%s0 + $0x128] sm:$0xf]
  %v93 = vld [vmem:[%s0 + $0x12c] sm:$0xf]
  %v94 = vld [vmem:[%s0 + $0x130] sm:$0xf]
  %v95 = vld [vmem:[%s0 + $0x134] sm:$0xf]
  %v96 = vld [vmem:[%s0 + $0x138] sm:$0xf]
  %v97 = vld [vmem:[%s0 + $0x13c] sm:$0xf]
  %v98 = vld [vmem:[%s0 + $0x140] sm:$0xf]
  %v99 = vld [vmem:[%s0 + $0x144] sm:$0xf]
  %v100 = vld [vmem:[%s0 + $0x148] sm:$0xf]
  %v101 = vld [vmem:[%s0 + $0x14c] sm:$0xf]
  %v102 = vld [vmem:[%s0 + $0x150] sm:$0xf]
  %v103 = vld [vmem:[%s0 + $0x154] sm:$0xf]
  %v104 = vld [vmem:[%s0 + $0x158] sm:$0xf]
  %v105 = vld [vmem:[%s0 + $0x15c] sm:$0xf]
  %v106 = vld [vmem:[%s0 + $0x160] sm:$0xf]
  %v107 = vld [vmem:[%s0 + $0x164] sm:$0xf]
  %v108 = vld [vmem:[%s0 + $0x168] sm:$0xf]
  %v109 = vld [vmem:[%s0 + $0x16c] sm:$0xf]
  %v110 = vld [vmem:[%s0 + $0x170] sm:$0xf]
  %v111 = vld [vmem:[%s0 + $0x174] sm:$0xf]
  %v112 = vld [vmem:[%s0 + $0x178] sm:$0xf]
  %v113 = vld [vmem:[%s0 + $0x17c] sm:$0xf]
  %v114 = vld [vmem:[%s0 + $0x180] sm:$0xf]
  %v115 = vld [vmem:[%s0 + $0x184] sm:$0xf]
  %v116 = vld [vmem:[%s0 + $0x188] sm:$0xf]
  %v117 = vld [vmem:[%s0 + $0x18c] sm:$0xf]
  %v118 = vld [vmem:[%s0 + $0x190] sm:$0xf]
  %v119 = vld [vmem:[%s0 + $0x194] sm:$0xf]
  %v120 = vld [vmem:[%s0 + $0x198] sm:$0xf]
  %v121 = vld [vmem:[%s0 + $0x19c] sm:$0xf]
  %v122 = vld [vmem:[%s0 + $0x1a0] sm:$0xf]
  %v123 = vld [vmem:[%s0 + $0x1a4] sm:$0xf]
  %v124 = vld [vmem:[%s0 + $0x1a8] sm:$0xf]
  %v125 = vld [vmem:[%s0 + $0x1ac] sm:$0xf]
  %v126 = vld [vmem:[%s0 + $0x1b0] sm:$0xf]
  %v127 = vld [vmem:[%s0 + $0x1b4] sm:$0xf]
  %v128 = vld [vmem:[%s0 + $0x1b8] sm:$0xf]
  %v129 = vld [vmem:[%s0 + $0x1bc] sm:$0xf]
  %v130 = vld [vmem:[%s0 + $0x1c0] sm:$0xf]
  %v131 = vld [vmem:[%s0 + $0x1c4] sm:$0xf]
  %v132 = vld [vmem:[%s0 + $0x1c8] sm:$0xf]
  %v133 = vld [vmem:[%s0 + $0x1cc] sm:$0xf]
  %v134 = vld [vmem:[%s0 + $0x1d0] sm:$0xf]
  %v135 = vld [vmem:[%s0 + $0x1d4] sm:$0xf]
  %v136 = vld [vmem:[%s0 + $0x1d8] sm:$0xf]
  %v137 = vld [vmem:[%s0 + $0x1dc] sm:$0xf]
  %v138 = vld [vmem:[%s0 + $0x1e0] sm:$0xf]
  %v139 = vld [vmem:[%s0 + $0x1e4] sm:$0xf]
  %v140 = vld [vmem:[%s0 + $0x1e8] sm:$0xf]
  %v141 = vld [vmem:[%s0 + $0x1ec] sm:$0xf]
  %v142 = vld [vmem:[%s0 + $0x1f0] sm:$0xf]
  %v143 = vld [vmem:[%s0 + $0x1f4] sm:$0xf]
  %v144 = vld [vmem:[%s0 + $0x1f8] sm:$0xf]
  %v145 = vld [vmem:[%s0 + $0x1fc] sm:$0xf]
  %v146 = vld [vmem:[%s1] sm:$0xf]
  %v147 = vld [vmem:[%s1 + $0x4] sm:$0xf]
  %v148 = vld [vmem:[%s1 + $0x8] sm:$0xf]
  %v149 = vld [vmem:[%s1 + $0xc] sm:$0xf]
  %v150 = vld [vmem:[%s1 + $0x10] sm:$0x7]
  %v279 = vunpack.c.l.b16 %v18
  %v280 = vunpack.c.l.b16 %v19
  %v281 = vunpack.c.l.b16 %v20
  %v282 = vunpack.c.l.b16 %v21
  %v283 = vunpack.c.l.b16 %v22
  %v284 = vunpack.c.l.b16 %v23
  %v285 = vunpack.c.l.b16 %v24
  %v286 = vunpack.c.l.b16 %v25
  %v287 = vunpack.c.l.b16 %v26
  %v288 = vunpack.c.l.b16 %v27
  %v289 = vunpack.c.l.b16 %v28
  %v290 = vunpack.c.l.b16 %v29
  %v291 = vunpack.c.l.b16 %v30
  %v292 = vunpack.c.l.b16 %v31
  %v293 = vunpack.c.l.b16 %v32
  %v294 = vunpack.c.l.b16 %v33
  %v295 = vunpack.c.l.b16 %v34
  %v296 = vunpack.c.l.b16 %v35
  %v297 = vunpack.c.l.b16 %v36
  %v298 = vunpack.c.l.b16 %v37
  %v299 = vunpack.c.l.b16 %v38
  %v300 = vunpack.c.l.b16 %v39
  %v301 = vunpack.c.l.b16 %v40
  %v302 = vunpack.c.l.b16 %v41
  %v303 = vunpack.c.l.b16 %v42
  %v304 = vunpack.c.l.b16 %v43
  %v305 = vunpack.c.l.b16 %v44
  %v306 = vunpack.c.l.b16 %v45
  %v307 = vunpack.c.l.b16 %v46
  %v308 = vunpack.c.l.b16 %v47
  %v309 = vunpack.c.l.b16 %v48
  %v310 = vunpack.c.l.b16 %v49
  %v311 = vunpack.c.l.b16 %v50
  %v312 = vunpack.c.l.b16 %v51
  %v313 = vunpack.c.l.b16 %v52
  %v314 = vunpack.c.l.b16 %v53
  %v315 = vunpack.c.l.b16 %v54
  %v316 = vunpack.c.l.b16 %v55
  %v317 = vunpack.c.l.b16 %v56
  %v318 = vunpack.c.l.b16 %v57
  %v319 = vunpack.c.l.b16 %v58
  %v320 = vunpack.c.l.b16 %v59
  %v321 = vunpack.c.l.b16 %v60
  %v322 = vunpack.c.l.b16 %v61
  %v323 = vunpack.c.l.b16 %v62
  %v324 = vunpack.c.l.b16 %v63
  %v325 = vunpack.c.l.b16 %v64
  %v326 = vunpack.c.l.b16 %v65
  %v327 = vunpack.c.l.b16 %v66
  %v328 = vunpack.c.l.b16 %v67
  %v329 = vunpack.c.l.b16 %v68
  %v330 = vunpack.c.l.b16 %v69
  %v331 = vunpack.c.l.b16 %v70
  %v332 = vunpack.c.l.b16 %v71
  %v333 = vunpack.c.l.b16 %v72
  %v334 = vunpack.c.l.b16 %v73
  %v335 = vunpack.c.l.b16 %v74
  %v336 = vunpack.c.l.b16 %v75
  %v337 = vunpack.c.l.b16 %v76
  %v338 = vunpack.c.l.b16 %v77
  %v339 = vunpack.c.l.b16 %v78
  %v340 = vunpack.c.l.b16 %v79
  %v341 = vunpack.c.l.b16 %v80
  %v342 = vunpack.c.l.b16 %v81
  %v343 = vunpack.c.l.b16 %v82
  %v344 = vunpack.c.l.b16 %v83
  %v345 = vunpack.c.l.b16 %v84
  %v346 = vunpack.c.l.b16 %v85
  %v347 = vunpack.c.l.b16 %v86
  %v348 = vunpack.c.l.b16 %v87
  %v349 = vunpack.c.l.b16 %v88
  %v350 = vunpack.c.l.b16 %v89
  %v351 = vunpack.c.l.b16 %v90
  %v352 = vunpack.c.l.b16 %v91
  %v353 = vunpack.c.l.b16 %v92
  %v354 = vunpack.c.l.b16 %v93
  %v355 = vunpack.c.l.b16 %v94
  %v356 = vunpack.c.l.b16 %v95
  %v357 = vunpack.c.l.b16 %v96
  %v358 = vunpack.c.l.b16 %v97
  %v359 = vunpack.c.l.b16 %v98
  %v360 = vunpack.c.l.b16 %v99
  %v361 = vunpack.c.l.b16 %v100
  %v362 = vunpack.c.l.b16 %v101
  %v363 = vunpack.c.l.b16 %v102
  %v364 = vunpack.c.l.b16 %v103
  %v365 = vunpack.c.l.b16 %v104
  %v366 = vunpack.c.l.b16 %v105
  %v367 = vunpack.c.l.b16 %v106
  %v368 = vunpack.c.l.b16 %v107
  %v369 = vunpack.c.l.b16 %v108
  %v370 = vunpack.c.l.b16 %v109
  %v371 = vunpack.c.l.b16 %v110
  %v372 = vunpack.c.l.b16 %v111
  %v373 = vunpack.c.l.b16 %v112
  %v374 = vunpack.c.l.b16 %v113
  %v375 = vunpack.c.l.b16 %v114
  %v376 = vunpack.c.l.b16 %v115
  %v377 = vunpack.c.l.b16 %v116
  %v378 = vunpack.c.l.b16 %v117
  %v379 = vunpack.c.l.b16 %v118
  %v380 = vunpack.c.l.b16 %v119
  %v381 = vunpack.c.l.b16 %v120
  %v382 = vunpack.c.l.b16 %v121
  %v383 = vunpack.c.l.b16 %v122
  %v384 = vunpack.c.l.b16 %v123
  %v385 = vunpack.c.l.b16 %v124
  %v386 = vunpack.c.l.b16 %v125
  %v387 = vunpack.c.l.b16 %v126
  %v388 = vunpack.c.l.b16 %v127
  %v389 = vunpack.c.l.b16 %v128
  %v390 = vunpack.c.l.b16 %v129
  %v391 = vunpack.c.l.b16 %v130
  %v392 = vunpack.c.l.b16 %v131
  %v393 = vunpack.c.l.b16 %v132
  %v394 = vunpack.c.l.b16 %v133
  %v395 = vunpack.c.l.b16 %v134
  %v396 = vunpack.c.l.b16 %v135
  %v397 = vunpack.c.l.b16 %v136
  %v398 = vunpack.c.l.b16 %v137
  %v399 = vunpack.c.l.b16 %v138
  %v400 = vunpack.c.l.b16 %v139
  %v401 = vunpack.c.l.b16 %v140
  %v402 = vunpack.c.l.b16 %v141
  %v403 = vunpack.c.l.b16 %v142
  %v404 = vunpack.c.l.b16 %v143
  %v405 = vunpack.c.l.b16 %v144
  %v406 = vunpack.c.l.b16 %v145
  %v407 = vpack.c.b16 %v280, %v279
  %v408 = vpack.c.b16 %v282, %v281
  %v409 = vpack.c.b16 %v284, %v283
  %v410 = vpack.c.b16 %v286, %v285
  %v411 = vpack.c.b16 %v288, %v287
  %v412 = vpack.c.b16 %v290, %v289
  %v413 = vpack.c.b16 %v292, %v291
  %v414 = vpack.c.b16 %v294, %v293
  %v415 = vpack.c.b16 %v296, %v295
  %v416 = vpack.c.b16 %v298, %v297
  %v417 = vpack.c.b16 %v300, %v299
  %v418 = vpack.c.b16 %v302, %v301
  %v419 = vpack.c.b16 %v304, %v303
  %v420 = vpack.c.b16 %v306, %v305
  %v421 = vpack.c.b16 %v308, %v307
  %v422 = vpack.c.b16 %v310, %v309
  %v423 = vpack.c.b16 %v312, %v311
  %v424 = vpack.c.b16 %v314, %v313
  %v425 = vpack.c.b16 %v316, %v315
  %v426 = vpack.c.b16 %v318, %v317
  %v427 = vpack.c.b16 %v320, %v319
  %v428 = vpack.c.b16 %v322, %v321
  %v429 = vpack.c.b16 %v324, %v323
  %v430 = vpack.c.b16 %v326, %v325
  %v431 = vpack.c.b16 %v328, %v327
  %v432 = vpack.c.b16 %v330, %v329
  %v433 = vpack.c.b16 %v332, %v331
  %v434 = vpack.c.b16 %v334, %v333
  %v435 = vpack.c.b16 %v336, %v335
  %v436 = vpack.c.b16 %v338, %v337
  %v437 = vpack.c.b16 %v340, %v339
  %v438 = vpack.c.b16 %v342, %v341
  %v439 = vpack.c.b16 %v344, %v343
  %v440 = vpack.c.b16 %v346, %v345
  %v441 = vpack.c.b16 %v348, %v347
  %v442 = vpack.c.b16 %v350, %v349
  %v443 = vpack.c.b16 %v352, %v351
  %v444 = vpack.c.b16 %v354, %v353
  %v445 = vpack.c.b16 %v356, %v355
  %v446 = vpack.c.b16 %v358, %v357
  %v447 = vpack.c.b16 %v360, %v359
  %v448 = vpack.c.b16 %v362, %v361
  %v449 = vpack.c.b16 %v364, %v363
  %v450 = vpack.c.b16 %v366, %v365
  %v451 = vpack.c.b16 %v368, %v367
  %v452 = vpack.c.b16 %v370, %v369
  %v453 = vpack.c.b16 %v372, %v371
  %v454 = vpack.c.b16 %v374, %v373
  %v455 = vpack.c.b16 %v376, %v375
  %v456 = vpack.c.b16 %v378, %v377
  %v457 = vpack.c.b16 %v380, %v379
  %v458 = vpack.c.b16 %v382, %v381
  %v459 = vpack.c.b16 %v384, %v383
  %v460 = vpack.c.b16 %v386, %v385
  %v461 = vpack.c.b16 %v388, %v387
  %v462 = vpack.c.b16 %v390, %v389
  %v463 = vpack.c.b16 %v392, %v391
  %v464 = vpack.c.b16 %v394, %v393
  %v465 = vpack.c.b16 %v396, %v395
  %v466 = vpack.c.b16 %v398, %v397
  %v467 = vpack.c.b16 %v400, %v399
  %v468 = vpack.c.b16 %v402, %v401
  %v469 = vpack.c.b16 %v404, %v403
  %v470 = vpack.c.b16 %v406, %v405
  %v476 = vunpack.c.l.b16 %v146
  %v477 = vunpack.c.l.b16 %v147
  %v478 = vunpack.c.l.b16 %v148
  %v479 = vunpack.c.l.b16 %v149
  %v480 = vunpack.c.l.b16 %v150
  %v481 = vpack.c.b16 %v477, %v476
  %v482 = vpack.c.b16 %v479, %v478
  %v483 = vpack.c.b16 %v480, %v480
  %vm486 = vcmask 302080
  %v488 = vsel %vm486, %v407, 0
  %v491 = vsel %vm486, %v408, 0
  %v494 = vsel %vm486, %v409, 0
  %v497 = vsel %vm486, %v410, 0
  %v500 = vsel %vm486, %v411, 0
  %v503 = vsel %vm486, %v412, 0
  %v506 = vsel %vm486, %v413, 0
  %v509 = vsel %vm486, %v414, 0
  %v512 = vsel %vm486, %v415, 0
  %v515 = vsel %vm486, %v416, 0
  %v518 = vsel %vm486, %v417, 0
  %v521 = vsel %vm486, %v418, 0
  %v524 = vsel %vm486, %v419, 0
  %v527 = vsel %vm486, %v420, 0
  %v530 = vsel %vm486, %v421, 0
  %v533 = vsel %vm486, %v422, 0
  %v536 = vsel %vm486, %v423, 0
  %v539 = vsel %vm486, %v424, 0
  %v542 = vsel %vm486, %v425, 0
  %v545 = vsel %vm486, %v426, 0
  %v548 = vsel %vm486, %v427, 0
  %v551 = vsel %vm486, %v428, 0
  %v554 = vsel %vm486, %v429, 0
  %v557 = vsel %vm486, %v430, 0
  %v560 = vsel %vm486, %v431, 0
  %v563 = vsel %vm486, %v432, 0
  %v566 = vsel %vm486, %v433, 0
  %v569 = vsel %vm486, %v434, 0
  %v572 = vsel %vm486, %v435, 0
  %v575 = vsel %vm486, %v436, 0
  %v578 = vsel %vm486, %v437, 0
  %v581 = vsel %vm486, %v438, 0
  %v584 = vsel %vm486, %v439, 0
  %v587 = vsel %vm486, %v440, 0
  %v590 = vsel %vm486, %v441, 0
  %v593 = vsel %vm486, %v442, 0
  %v596 = vsel %vm486, %v443, 0
  %v599 = vsel %vm486, %v444, 0
  %v602 = vsel %vm486, %v445, 0
  %v605 = vsel %vm486, %v446, 0
  %v608 = vsel %vm486, %v447, 0
  %v611 = vsel %vm486, %v448, 0
  %v614 = vsel %vm486, %v449, 0
  %v617 = vsel %vm486, %v450, 0
  %v620 = vsel %vm486, %v451, 0
  %v623 = vsel %vm486, %v452, 0
  %v626 = vsel %vm486, %v453, 0
  %v629 = vsel %vm486, %v454, 0
  %v632 = vsel %vm486, %v455, 0
  %v635 = vsel %vm486, %v456, 0
  %v638 = vsel %vm486, %v457, 0
  %v641 = vsel %vm486, %v458, 0
  %v644 = vsel %vm486, %v459, 0
  %v647 = vsel %vm486, %v460, 0
  %v650 = vsel %vm486, %v461, 0
  %v653 = vsel %vm486, %v462, 0
  %v656 = vsel %vm486, %v463, 0
  %v659 = vsel %vm486, %v464, 0
  %v662 = vsel %vm486, %v465, 0
  %v665 = vsel %vm486, %v466, 0
  %v668 = vsel %vm486, %v467, 0
  %v671 = vsel %vm486, %v468, 0
  %v674 = vsel %vm486, %v469, 0
  %v677 = vsel %vm486, %v470, 0
  %vm679 = vcmask 1041408
  %vm680 = vcmask 1042432
  %v681 = vsel %vm679, 4294967295, 65535
  %v682 = vsel %vm680, %v681, 0
  %v684 = vand.u32 %v483, %v682
  %686 = vmatprep.subr.bf16.mxu0 0
  %687 = vmatpush1.bf16.msra.mxu0 0
  %688 = vmatprep.subr.bf16.mxu0 0
  %689 = vmatpush1.bf16.msra.mxu0 0
  %690 = vmatprep.subr.bf16.mxu0 0
  %691 = vmatpush1.bf16.msra.mxu0 0
  %692 = vmatprep.subr.bf16.mxu0 0
  %693 = vmatpush1.bf16.msra.mxu0 0
  %694 = vmatprep.subr.bf16.mxu0 0
  %695 = vmatpush1.bf16.msra.mxu0 0
  %696 = vmatprep.subr.bf16.mxu0 0
  %697 = vmatpush1.bf16.msra.mxu0 %v684
  %698 = vmatprep.subr.bf16.mxu0 0
  %699 = vmatpush1.bf16.msra.mxu0 %v482
  %700 = vmatprep.subr.bf16.mxu0 0
  %701 = vmatpush1.bf16.msra.mxu0 %v481
  %702 = vmatprep.subr.bf16.mxu0 0
  %703 = vmatpush2.bf16.msra.mxu0 0
  %704 = vmatprep.subr.bf16.mxu0 0
  %705 = vmatpush2.bf16.msra.mxu0 0
  %706 = vmatprep.subr.bf16.mxu0 0
  %707 = vmatpush2.bf16.msra.mxu0 0
  %708 = vmatprep.subr.bf16.mxu0 0
  %709 = vmatpush2.bf16.msra.mxu0 0
  %710 = vmatprep.subr.bf16.mxu0 0
  %711 = vmatpush2.bf16.msra.mxu0 0
  %712 = vmatprep.subr.bf16.mxu0 0
  %713 = vmatpush2.bf16.msra.mxu0 0
  %714 = vmatprep.subr.bf16.mxu0 0
  %715 = vmatpush2.bf16.msra.mxu0 0
  %716 = vmatprep.subr.bf16.mxu0 0
  %717 = vmatpush2.bf16.msra.mxu0 0
  %718 = vmatprep.mubr.bf16.mxu0 0
  %719 = vmatmul.mubr.bf16.gmra.mxu0 %v488
  %v720 = vpop.f32.mrf.mxu0
  %v721 = vadd.f32 0.0, %v720
  %v722 = vpop.f32.mrf.mxu0
  %v723 = vpop.f32.mrf.mxu0
  %v724 = vadd.f32 0.0, %v723
  %v725 = vpop.f32.mrf.mxu0
  %726 = vmatprep.mubr.bf16.mxu0 0
  %727 = vmatmul.mubr.bf16.gmra.mxu0 %v491
  %v728 = vpop.f32.mrf.mxu0
  %v729 = vadd.f32 0.0, %v728
  %v730 = vpop.f32.mrf.mxu0
  %v731 = vpop.f32.mrf.mxu0
  %v732 = vadd.f32 0.0, %v731
  %v733 = vpop.f32.mrf.mxu0
  %734 = vmatprep.mubr.bf16.mxu0 0
  %735 = vmatmul.mubr.bf16.gmra.mxu0 %v494
  %v736 = vpop.f32.mrf.mxu0
  %v737 = vadd.f32 0.0, %v736
  %v738 = vpop.f32.mrf.mxu0
  %v739 = vpop.f32.mrf.mxu0
  %v740 = vadd.f32 0.0, %v739
  %v741 = vpop.f32.mrf.mxu0
  %742 = vmatprep.mubr.bf16.mxu0 0
  %743 = vmatmul.mubr.bf16.gmra.mxu0 %v497
  %v744 = vpop.f32.mrf.mxu0
  %v745 = vadd.f32 0.0, %v744
  %v746 = vpop.f32.mrf.mxu0
  %v747 = vpop.f32.mrf.mxu0
  %v748 = vadd.f32 0.0, %v747
  %v749 = vpop.f32.mrf.mxu0
  %750 = vmatprep.mubr.bf16.mxu0 0
  %751 = vmatmul.mubr.bf16.gmra.mxu0 %v500
  %v752 = vpop.f32.mrf.mxu0
  %v753 = vadd.f32 0.0, %v752
  %v754 = vpop.f32.mrf.mxu0
  %v755 = vpop.f32.mrf.mxu0
  %v756 = vadd.f32 0.0, %v755
  %v757 = vpop.f32.mrf.mxu0
  %758 = vmatprep.mubr.bf16.mxu0 0
  %759 = vmatmul.mubr.bf16.gmra.mxu0 %v503
  %v760 = vpop.f32.mrf.mxu0
  %v761 = vadd.f32 0.0, %v760
  %v762 = vpop.f32.mrf.mxu0
  %v763 = vpop.f32.mrf.mxu0
  %v764 = vadd.f32 0.0, %v763
  %v765 = vpop.f32.mrf.mxu0
  %766 = vmatprep.mubr.bf16.mxu0 0
  %767 = vmatmul.mubr.bf16.gmra.mxu0 %v506
  %v768 = vpop.f32.mrf.mxu0
  %v769 = vadd.f32 0.0, %v768
  %v770 = vpop.f32.mrf.mxu0
  %v771 = vpop.f32.mrf.mxu0
  %v772 = vadd.f32 0.0, %v771
  %v773 = vpop.f32.mrf.mxu0
  %774 = vmatprep.mubr.bf16.mxu0 0
  %775 = vmatmul.mubr.bf16.gmra.mxu0 %v509
  %v776 = vpop.f32.mrf.mxu0
  %v777 = vadd.f32 0.0, %v776
  %v778 = vpop.f32.mrf.mxu0
  %v779 = vpop.f32.mrf.mxu0
  %v780 = vadd.f32 0.0, %v779
  %v781 = vpop.f32.mrf.mxu0
  %782 = vmatprep.mubr.bf16.mxu0 0
  %783 = vmatmul.mubr.bf16.gmra.mxu0 %v512
  %v784 = vpop.f32.mrf.mxu0
  %v785 = vadd.f32 0.0, %v784
  %v786 = vpop.f32.mrf.mxu0
  %v787 = vpop.f32.mrf.mxu0
  %v788 = vadd.f32 0.0, %v787
  %v789 = vpop.f32.mrf.mxu0
  %790 = vmatprep.mubr.bf16.mxu0 0
  %791 = vmatmul.mubr.bf16.gmra.mxu0 %v515
  %v792 = vpop.f32.mrf.mxu0
  %v793 = vadd.f32 0.0, %v792
  %v794 = vpop.f32.mrf.mxu0
  %v795 = vpop.f32.mrf.mxu0
  %v796 = vadd.f32 0.0, %v795
  %v797 = vpop.f32.mrf.mxu0
  %798 = vmatprep.mubr.bf16.mxu0 0
  %799 = vmatmul.mubr.bf16.gmra.mxu0 %v518
  %v800 = vpop.f32.mrf.mxu0
  %v801 = vadd.f32 0.0, %v800
  %v802 = vpop.f32.mrf.mxu0
  %v803 = vpop.f32.mrf.mxu0
  %v804 = vadd.f32 0.0, %v803
  %v805 = vpop.f32.mrf.mxu0
  %806 = vmatprep.mubr.bf16.mxu0 0
  %807 = vmatmul.mubr.bf16.gmra.mxu0 %v521
  %v808 = vpop.f32.mrf.mxu0
  %v809 = vadd.f32 0.0, %v808
  %v810 = vpop.f32.mrf.mxu0
  %v811 = vpop.f32.mrf.mxu0
  %v812 = vadd.f32 0.0, %v811
  %v813 = vpop.f32.mrf.mxu0
  %814 = vmatprep.mubr.bf16.mxu0 0
  %815 = vmatmul.mubr.bf16.gmra.mxu0 %v524
  %v816 = vpop.f32.mrf.mxu0
  %v817 = vadd.f32 0.0, %v816
  %v818 = vpop.f32.mrf.mxu0
  %v819 = vpop.f32.mrf.mxu0
  %v820 = vadd.f32 0.0, %v819
  %v821 = vpop.f32.mrf.mxu0
  %822 = vmatprep.mubr.bf16.mxu0 0
  %823 = vmatmul.mubr.bf16.gmra.mxu0 %v527
  %v824 = vpop.f32.mrf.mxu0
  %v825 = vadd.f32 0.0, %v824
  %v826 = vpop.f32.mrf.mxu0
  %v827 = vpop.f32.mrf.mxu0
  %v828 = vadd.f32 0.0, %v827
  %v829 = vpop.f32.mrf.mxu0
  %830 = vmatprep.mubr.bf16.mxu0 0
  %831 = vmatmul.mubr.bf16.gmra.mxu0 %v530
  %v832 = vpop.f32.mrf.mxu0
  %v833 = vadd.f32 0.0, %v832
  %v834 = vpop.f32.mrf.mxu0
  %v835 = vpop.f32.mrf.mxu0
  %v836 = vadd.f32 0.0, %v835
  %v837 = vpop.f32.mrf.mxu0
  %838 = vmatprep.mubr.bf16.mxu0 0
  %839 = vmatmul.mubr.bf16.gmra.mxu0 %v533
  %v840 = vpop.f32.mrf.mxu0
  %v841 = vadd.f32 0.0, %v840
  %v842 = vpop.f32.mrf.mxu0
  %v843 = vpop.f32.mrf.mxu0
  %v844 = vadd.f32 0.0, %v843
  %v845 = vpop.f32.mrf.mxu0
  %846 = vmatprep.mubr.bf16.mxu0 0
  %847 = vmatmul.mubr.bf16.gmra.mxu0 %v536
  %v848 = vpop.f32.mrf.mxu0
  %v849 = vadd.f32 0.0, %v848
  %v850 = vpop.f32.mrf.mxu0
  %v851 = vpop.f32.mrf.mxu0
  %v852 = vadd.f32 0.0, %v851
  %v853 = vpop.f32.mrf.mxu0
  %854 = vmatprep.mubr.bf16.mxu0 0
  %855 = vmatmul.mubr.bf16.gmra.mxu0 %v539
  %v856 = vpop.f32.mrf.mxu0
  %v857 = vadd.f32 0.0, %v856
  %v858 = vpop.f32.mrf.mxu0
  %v859 = vpop.f32.mrf.mxu0
  %v860 = vadd.f32 0.0, %v859
  %v861 = vpop.f32.mrf.mxu0
  %862 = vmatprep.mubr.bf16.mxu0 0
  %863 = vmatmul.mubr.bf16.gmra.mxu0 %v542
  %v864 = vpop.f32.mrf.mxu0
  %v865 = vadd.f32 0.0, %v864
  %v866 = vpop.f32.mrf.mxu0
  %v867 = vpop.f32.mrf.mxu0
  %v868 = vadd.f32 0.0, %v867
  %v869 = vpop.f32.mrf.mxu0
  %870 = vmatprep.mubr.bf16.mxu0 0
  %871 = vmatmul.mubr.bf16.gmra.mxu0 %v545
  %v872 = vpop.f32.mrf.mxu0
  %v873 = vadd.f32 0.0, %v872
  %v874 = vpop.f32.mrf.mxu0
  %v875 = vpop.f32.mrf.mxu0
  %v876 = vadd.f32 0.0, %v875
  %v877 = vpop.f32.mrf.mxu0
  %878 = vmatprep.mubr.bf16.mxu0 0
  %879 = vmatmul.mubr.bf16.gmra.mxu0 %v548
  %v880 = vpop.f32.mrf.mxu0
  %v881 = vadd.f32 0.0, %v880
  %v882 = vpop.f32.mrf.mxu0
  %v883 = vpop.f32.mrf.mxu0
  %v884 = vadd.f32 0.0, %v883
  %v885 = vpop.f32.mrf.mxu0
  %886 = vmatprep.mubr.bf16.mxu0 0
  %887 = vmatmul.mubr.bf16.gmra.mxu0 %v551
  %v888 = vpop.f32.mrf.mxu0
  %v889 = vadd.f32 0.0, %v888
  %v890 = vpop.f32.mrf.mxu0
  %v891 = vpop.f32.mrf.mxu0
  %v892 = vadd.f32 0.0, %v891
  %v893 = vpop.f32.mrf.mxu0
  %894 = vmatprep.mubr.bf16.mxu0 0
  %895 = vmatmul.mubr.bf16.gmra.mxu0 %v554
  %v896 = vpop.f32.mrf.mxu0
  %v897 = vadd.f32 0.0, %v896
  %v898 = vpop.f32.mrf.mxu0
  %v899 = vpop.f32.mrf.mxu0
  %v900 = vadd.f32 0.0, %v899
  %v901 = vpop.f32.mrf.mxu0
  %902 = vmatprep.mubr.bf16.mxu0 0
  %903 = vmatmul.mubr.bf16.gmra.mxu0 %v557
  %v904 = vpop.f32.mrf.mxu0
  %v905 = vadd.f32 0.0, %v904
  %v906 = vpop.f32.mrf.mxu0
  %v907 = vpop.f32.mrf.mxu0
  %v908 = vadd.f32 0.0, %v907
  %v909 = vpop.f32.mrf.mxu0
  %910 = vmatprep.mubr.bf16.mxu0 0
  %911 = vmatmul.mubr.bf16.gmra.mxu0 %v560
  %v912 = vpop.f32.mrf.mxu0
  %v913 = vadd.f32 0.0, %v912
  %v914 = vpop.f32.mrf.mxu0
  %v915 = vpop.f32.mrf.mxu0
  %v916 = vadd.f32 0.0, %v915
  %v917 = vpop.f32.mrf.mxu0
  %918 = vmatprep.mubr.bf16.mxu0 0
  %919 = vmatmul.mubr.bf16.gmra.mxu0 %v563
  %v920 = vpop.f32.mrf.mxu0
  %v921 = vadd.f32 0.0, %v920
  %v922 = vpop.f32.mrf.mxu0
  %v923 = vpop.f32.mrf.mxu0
  %v924 = vadd.f32 0.0, %v923
  %v925 = vpop.f32.mrf.mxu0
  %926 = vmatprep.mubr.bf16.mxu0 0
  %927 = vmatmul.mubr.bf16.gmra.mxu0 %v566
  %v928 = vpop.f32.mrf.mxu0
  %v929 = vadd.f32 0.0, %v928
  %v930 = vpop.f32.mrf.mxu0
  %v931 = vpop.f32.mrf.mxu0
  %v932 = vadd.f32 0.0, %v931
  %v933 = vpop.f32.mrf.mxu0
  %934 = vmatprep.mubr.bf16.mxu0 0
  %935 = vmatmul.mubr.bf16.gmra.mxu0 %v569
  %v936 = vpop.f32.mrf.mxu0
  %v937 = vadd.f32 0.0, %v936
  %v938 = vpop.f32.mrf.mxu0
  %v939 = vpop.f32.mrf.mxu0
  %v940 = vadd.f32 0.0, %v939
  %v941 = vpop.f32.mrf.mxu0
  %942 = vmatprep.mubr.bf16.mxu0 0
  %943 = vmatmul.mubr.bf16.gmra.mxu0 %v572
  %v944 = vpop.f32.mrf.mxu0
  %v945 = vadd.f32 0.0, %v944
  %v946 = vpop.f32.mrf.mxu0
  %v947 = vpop.f32.mrf.mxu0
  %v948 = vadd.f32 0.0, %v947
  %v949 = vpop.f32.mrf.mxu0
  %950 = vmatprep.mubr.bf16.mxu0 0
  %951 = vmatmul.mubr.bf16.gmra.mxu0 %v575
  %v952 = vpop.f32.mrf.mxu0
  %v953 = vadd.f32 0.0, %v952
  %v954 = vpop.f32.mrf.mxu0
  %v955 = vpop.f32.mrf.mxu0
  %v956 = vadd.f32 0.0, %v955
  %v957 = vpop.f32.mrf.mxu0
  %958 = vmatprep.mubr.bf16.mxu0 0
  %959 = vmatmul.mubr.bf16.gmra.mxu0 %v578
  %v960 = vpop.f32.mrf.mxu0
  %v961 = vadd.f32 0.0, %v960
  %v962 = vpop.f32.mrf.mxu0
  %v963 = vpop.f32.mrf.mxu0
  %v964 = vadd.f32 0.0, %v963
  %v965 = vpop.f32.mrf.mxu0
  %966 = vmatprep.mubr.bf16.mxu0 0
  %967 = vmatmul.mubr.bf16.gmra.mxu0 %v581
  %v968 = vpop.f32.mrf.mxu0
  %v969 = vadd.f32 0.0, %v968
  %v970 = vpop.f32.mrf.mxu0
  %v971 = vpop.f32.mrf.mxu0
  %v972 = vadd.f32 0.0, %v971
  %v973 = vpop.f32.mrf.mxu0
  %974 = vmatprep.mubr.bf16.mxu0 0
  %975 = vmatmul.mubr.bf16.gmra.mxu0 %v584
  %v976 = vpop.f32.mrf.mxu0
  %v977 = vadd.f32 0.0, %v976
  %v978 = vpop.f32.mrf.mxu0
  %v979 = vpop.f32.mrf.mxu0
  %v980 = vadd.f32 0.0, %v979
  %v981 = vpop.f32.mrf.mxu0
  %982 = vmatprep.mubr.bf16.mxu0 0
  %983 = vmatmul.mubr.bf16.gmra.mxu0 %v587
  %v984 = vpop.f32.mrf.mxu0
  %v985 = vadd.f32 0.0, %v984
  %v986 = vpop.f32.mrf.mxu0
  %v987 = vpop.f32.mrf.mxu0
  %v988 = vadd.f32 0.0, %v987
  %v989 = vpop.f32.mrf.mxu0
  %990 = vmatprep.mubr.bf16.mxu0 0
  %991 = vmatmul.mubr.bf16.gmra.mxu0 %v590
  %v992 = vpop.f32.mrf.mxu0
  %v993 = vadd.f32 0.0, %v992
  %v994 = vpop.f32.mrf.mxu0
  %v995 = vpop.f32.mrf.mxu0
  %v996 = vadd.f32 0.0, %v995
  %v997 = vpop.f32.mrf.mxu0
  %998 = vmatprep.mubr.bf16.mxu0 0
  %999 = vmatmul.mubr.bf16.gmra.mxu0 %v593
  %v1000 = vpop.f32.mrf.mxu0
  %v1001 = vadd.f32 0.0, %v1000
  %v1002 = vpop.f32.mrf.mxu0
  %v1003 = vpop.f32.mrf.mxu0
  %v1004 = vadd.f32 0.0, %v1003
  %v1005 = vpop.f32.mrf.mxu0
  %1006 = vmatprep.mubr.bf16.mxu0 0
  %1007 = vmatmul.mubr.bf16.gmra.mxu0 %v596
  %v1008 = vpop.f32.mrf.mxu0
  %v1009 = vadd.f32 0.0, %v1008
  %v1010 = vpop.f32.mrf.mxu0
  %v1011 = vpop.f32.mrf.mxu0
  %v1012 = vadd.f32 0.0, %v1011
  %v1013 = vpop.f32.mrf.mxu0
  %1014 = vmatprep.mubr.bf16.mxu0 0
  %1015 = vmatmul.mubr.bf16.gmra.mxu0 %v599
  %v1016 = vpop.f32.mrf.mxu0
  %v1017 = vadd.f32 0.0, %v1016
  %v1018 = vpop.f32.mrf.mxu0
  %v1019 = vpop.f32.mrf.mxu0
  %v1020 = vadd.f32 0.0, %v1019
  %v1021 = vpop.f32.mrf.mxu0
  %1022 = vmatprep.mubr.bf16.mxu0 0
  %1023 = vmatmul.mubr.bf16.gmra.mxu0 %v602
  %v1024 = vpop.f32.mrf.mxu0
  %v1025 = vadd.f32 0.0, %v1024
  %v1026 = vpop.f32.mrf.mxu0
  %v1027 = vpop.f32.mrf.mxu0
  %v1028 = vadd.f32 0.0, %v1027
  %v1029 = vpop.f32.mrf.mxu0
  %1030 = vmatprep.mubr.bf16.mxu0 0
  %1031 = vmatmul.mubr.bf16.gmra.mxu0 %v605
  %v1032 = vpop.f32.mrf.mxu0
  %v1033 = vadd.f32 0.0, %v1032
  %v1034 = vpop.f32.mrf.mxu0
  %v1035 = vpop.f32.mrf.mxu0
  %v1036 = vadd.f32 0.0, %v1035
  %v1037 = vpop.f32.mrf.mxu0
  %1038 = vmatprep.mubr.bf16.mxu0 0
  %1039 = vmatmul.mubr.bf16.gmra.mxu0 %v608
  %v1040 = vpop.f32.mrf.mxu0
  %v1041 = vadd.f32 0.0, %v1040
  %v1042 = vpop.f32.mrf.mxu0
  %v1043 = vpop.f32.mrf.mxu0
  %v1044 = vadd.f32 0.0, %v1043
  %v1045 = vpop.f32.mrf.mxu0
  %1046 = vmatprep.mubr.bf16.mxu0 0
  %1047 = vmatmul.mubr.bf16.gmra.mxu0 %v611
  %v1048 = vpop.f32.mrf.mxu0
  %v1049 = vadd.f32 0.0, %v1048
  %v1050 = vpop.f32.mrf.mxu0
  %v1051 = vpop.f32.mrf.mxu0
  %v1052 = vadd.f32 0.0, %v1051
  %v1053 = vpop.f32.mrf.mxu0
  %1054 = vmatprep.mubr.bf16.mxu0 0
  %1055 = vmatmul.mubr.bf16.gmra.mxu0 %v614
  %v1056 = vpop.f32.mrf.mxu0
  %v1057 = vadd.f32 0.0, %v1056
  %v1058 = vpop.f32.mrf.mxu0
  %v1059 = vpop.f32.mrf.mxu0
  %v1060 = vadd.f32 0.0, %v1059
  %v1061 = vpop.f32.mrf.mxu0
  %1062 = vmatprep.mubr.bf16.mxu0 0
  %1063 = vmatmul.mubr.bf16.gmra.mxu0 %v617
  %v1064 = vpop.f32.mrf.mxu0
  %v1065 = vadd.f32 0.0, %v1064
  %v1066 = vpop.f32.mrf.mxu0
  %v1067 = vpop.f32.mrf.mxu0
  %v1068 = vadd.f32 0.0, %v1067
  %v1069 = vpop.f32.mrf.mxu0
  %1070 = vmatprep.mubr.bf16.mxu0 0
  %1071 = vmatmul.mubr.bf16.gmra.mxu0 %v620
  %v1072 = vpop.f32.mrf.mxu0
  %v1073 = vadd.f32 0.0, %v1072
  %v1074 = vpop.f32.mrf.mxu0
  %v1075 = vpop.f32.mrf.mxu0
  %v1076 = vadd.f32 0.0, %v1075
  %v1077 = vpop.f32.mrf.mxu0
  %1078 = vmatprep.mubr.bf16.mxu0 0
  %1079 = vmatmul.mubr.bf16.gmra.mxu0 %v623
  %v1080 = vpop.f32.mrf.mxu0
  %v1081 = vadd.f32 0.0, %v1080
  %v1082 = vpop.f32.mrf.mxu0
  %v1083 = vpop.f32.mrf.mxu0
  %v1084 = vadd.f32 0.0, %v1083
  %v1085 = vpop.f32.mrf.mxu0
  %1086 = vmatprep.mubr.bf16.mxu0 0
  %1087 = vmatmul.mubr.bf16.gmra.mxu0 %v626
  %v1088 = vpop.f32.mrf.mxu0
  %v1089 = vadd.f32 0.0, %v1088
  %v1090 = vpop.f32.mrf.mxu0
  %v1091 = vpop.f32.mrf.mxu0
  %v1092 = vadd.f32 0.0, %v1091
  %v1093 = vpop.f32.mrf.mxu0
  %1094 = vmatprep.mubr.bf16.mxu0 0
  %1095 = vmatmul.mubr.bf16.gmra.mxu0 %v629
  %v1096 = vpop.f32.mrf.mxu0
  %v1097 = vadd.f32 0.0, %v1096
  %v1098 = vpop.f32.mrf.mxu0
  %v1099 = vpop.f32.mrf.mxu0
  %v1100 = vadd.f32 0.0, %v1099
  %v1101 = vpop.f32.mrf.mxu0
  %1102 = vmatprep.mubr.bf16.mxu0 0
  %1103 = vmatmul.mubr.bf16.gmra.mxu0 %v632
  %v1104 = vpop.f32.mrf.mxu0
  %v1105 = vadd.f32 0.0, %v1104
  %v1106 = vpop.f32.mrf.mxu0
  %v1107 = vpop.f32.mrf.mxu0
  %v1108 = vadd.f32 0.0, %v1107
  %v1109 = vpop.f32.mrf.mxu0
  %1110 = vmatprep.mubr.bf16.mxu0 0
  %1111 = vmatmul.mubr.bf16.gmra.mxu0 %v635
  %v1112 = vpop.f32.mrf.mxu0
  %v1113 = vadd.f32 0.0, %v1112
  %v1114 = vpop.f32.mrf.mxu0
  %v1115 = vpop.f32.mrf.mxu0
  %v1116 = vadd.f32 0.0, %v1115
  %v1117 = vpop.f32.mrf.mxu0
  %1118 = vmatprep.mubr.bf16.mxu0 0
  %1119 = vmatmul.mubr.bf16.gmra.mxu0 %v638
  %v1120 = vpop.f32.mrf.mxu0
  %v1121 = vadd.f32 0.0, %v1120
  %v1122 = vpop.f32.mrf.mxu0
  %v1123 = vpop.f32.mrf.mxu0
  %v1124 = vadd.f32 0.0, %v1123
  %v1125 = vpop.f32.mrf.mxu0
  %1126 = vmatprep.mubr.bf16.mxu0 0
  %1127 = vmatmul.mubr.bf16.gmra.mxu0 %v641
  %v1128 = vpop.f32.mrf.mxu0
  %v1129 = vadd.f32 0.0, %v1128
  %v1130 = vpop.f32.mrf.mxu0
  %v1131 = vpop.f32.mrf.mxu0
  %v1132 = vadd.f32 0.0, %v1131
  %v1133 = vpop.f32.mrf.mxu0
  %1134 = vmatprep.mubr.bf16.mxu0 0
  %1135 = vmatmul.mubr.bf16.gmra.mxu0 %v644
  %v1136 = vpop.f32.mrf.mxu0
  %v1137 = vadd.f32 0.0, %v1136
  %v1138 = vpop.f32.mrf.mxu0
  %v1139 = vpop.f32.mrf.mxu0
  %v1140 = vadd.f32 0.0, %v1139
  %v1141 = vpop.f32.mrf.mxu0
  %1142 = vmatprep.mubr.bf16.mxu0 0
  %1143 = vmatmul.mubr.bf16.gmra.mxu0 %v647
  %v1144 = vpop.f32.mrf.mxu0
  %v1145 = vadd.f32 0.0, %v1144
  %v1146 = vpop.f32.mrf.mxu0
  %v1147 = vpop.f32.mrf.mxu0
  %v1148 = vadd.f32 0.0, %v1147
  %v1149 = vpop.f32.mrf.mxu0
  %1150 = vmatprep.mubr.bf16.mxu0 0
  %1151 = vmatmul.mubr.bf16.gmra.mxu0 %v650
  %v1152 = vpop.f32.mrf.mxu0
  %v1153 = vadd.f32 0.0, %v1152
  %v1154 = vpop.f32.mrf.mxu0
  %v1155 = vpop.f32.mrf.mxu0
  %v1156 = vadd.f32 0.0, %v1155
  %v1157 = vpop.f32.mrf.mxu0
  %1158 = vmatprep.mubr.bf16.mxu0 0
  %1159 = vmatmul.mubr.bf16.gmra.mxu0 %v653
  %v1160 = vpop.f32.mrf.mxu0
  %v1161 = vadd.f32 0.0, %v1160
  %v1162 = vpop.f32.mrf.mxu0
  %v1163 = vpop.f32.mrf.mxu0
  %v1164 = vadd.f32 0.0, %v1163
  %v1165 = vpop.f32.mrf.mxu0
  %1166 = vmatprep.mubr.bf16.mxu0 0
  %1167 = vmatmul.mubr.bf16.gmra.mxu0 %v656
  %v1168 = vpop.f32.mrf.mxu0
  %v1169 = vadd.f32 0.0, %v1168
  %v1170 = vpop.f32.mrf.mxu0
  %v1171 = vpop.f32.mrf.mxu0
  %v1172 = vadd.f32 0.0, %v1171
  %v1173 = vpop.f32.mrf.mxu0
  %1174 = vmatprep.mubr.bf16.mxu0 0
  %1175 = vmatmul.mubr.bf16.gmra.mxu0 %v659
  %v1176 = vpop.f32.mrf.mxu0
  %v1177 = vadd.f32 0.0, %v1176
  %v1178 = vpop.f32.mrf.mxu0
  %v1179 = vpop.f32.mrf.mxu0
  %v1180 = vadd.f32 0.0, %v1179
  %v1181 = vpop.f32.mrf.mxu0
  %1182 = vmatprep.mubr.bf16.mxu0 0
  %1183 = vmatmul.mubr.bf16.gmra.mxu0 %v662
  %v1184 = vpop.f32.mrf.mxu0
  %v1185 = vadd.f32 0.0, %v1184
  %v1186 = vpop.f32.mrf.mxu0
  %v1187 = vpop.f32.mrf.mxu0
  %v1188 = vadd.f32 0.0, %v1187
  %v1189 = vpop.f32.mrf.mxu0
  %1190 = vmatprep.mubr.bf16.mxu0 0
  %1191 = vmatmul.mubr.bf16.gmra.mxu0 %v665
  %v1192 = vpop.f32.mrf.mxu0
  %v1193 = vadd.f32 0.0, %v1192
  %v1194 = vpop.f32.mrf.mxu0
  %v1195 = vpop.f32.mrf.mxu0
  %v1196 = vadd.f32 0.0, %v1195
  %v1197 = vpop.f32.mrf.mxu0
  %1198 = vmatprep.mubr.bf16.mxu0 0
  %1199 = vmatmul.mubr.bf16.gmra.mxu0 %v668
  %v1200 = vpop.f32.mrf.mxu0
  %v1201 = vadd.f32 0.0, %v1200
  %v1202 = vpop.f32.mrf.mxu0
  %v1203 = vpop.f32.mrf.mxu0
  %v1204 = vadd.f32 0.0, %v1203
  %v1205 = vpop.f32.mrf.mxu0
  %1206 = vmatprep.mubr.bf16.mxu0 0
  %1207 = vmatmul.mubr.bf16.gmra.mxu0 %v671
  %v1208 = vpop.f32.mrf.mxu0
  %v1209 = vadd.f32 0.0, %v1208
  %v1210 = vpop.f32.mrf.mxu0
  %v1211 = vpop.f32.mrf.mxu0
  %v1212 = vadd.f32 0.0, %v1211
  %v1213 = vpop.f32.mrf.mxu0
  %1214 = vmatprep.mubr.bf16.mxu0 0
  %1215 = vmatmul.mubr.bf16.gmra.mxu0 %v674
  %v1216 = vpop.f32.mrf.mxu0
  %v1217 = vadd.f32 0.0, %v1216
  %v1218 = vpop.f32.mrf.mxu0
  %v1219 = vpop.f32.mrf.mxu0
  %v1220 = vadd.f32 0.0, %v1219
  %v1221 = vpop.f32.mrf.mxu0
  %1222 = vmatprep.mubr.bf16.mxu0 0
  %1223 = vmatmul.mubr.bf16.gmra.mxu0 %v677
  %v1224 = vpop.f32.mrf.mxu0
  %v1225 = vadd.f32 0.0, %v1224
  %v1226 = vpop.f32.mrf.mxu0
  %v1227 = vpop.f32.mrf.mxu0
  %v1228 = vadd.f32 0.0, %v1227
  %v1229 = vpop.f32.mrf.mxu0
  %1230 = vdwg.mxu0
  %v1231 = vmax.f32 %v721, 0.0
  %v1232 = vmax.f32 %v724, 0.0
  %v1233 = vmax.f32 %v729, 0.0
  %v1234 = vmax.f32 %v732, 0.0
  %v1235 = vmax.f32 %v737, 0.0
  %v1236 = vmax.f32 %v740, 0.0
  %v1237 = vmax.f32 %v745, 0.0
  %v1238 = vmax.f32 %v748, 0.0
  %v1239 = vmax.f32 %v753, 0.0
  %v1240 = vmax.f32 %v756, 0.0
  %v1241 = vmax.f32 %v761, 0.0
  %v1242 = vmax.f32 %v764, 0.0
  %v1243 = vmax.f32 %v769, 0.0
  %v1244 = vmax.f32 %v772, 0.0
  %v1245 = vmax.f32 %v777, 0.0
  %v1246 = vmax.f32 %v780, 0.0
  %v1247 = vmax.f32 %v785, 0.0
  %v1248 = vmax.f32 %v788, 0.0
  %v1249 = vmax.f32 %v793, 0.0
  %v1250 = vmax.f32 %v796, 0.0
  %v1251 = vmax.f32 %v801, 0.0
  %v1252 = vmax.f32 %v804, 0.0
  %v1253 = vmax.f32 %v809, 0.0
  %v1254 = vmax.f32 %v812, 0.0
  %v1255 = vmax.f32 %v817, 0.0
  %v1256 = vmax.f32 %v820, 0.0
  %v1257 = vmax.f32 %v825, 0.0
  %v1258 = vmax.f32 %v828, 0.0
  %v1259 = vmax.f32 %v833, 0.0
  %v1260 = vmax.f32 %v836, 0.0
  %v1261 = vmax.f32 %v841, 0.0
  %v1262 = vmax.f32 %v844, 0.0
  %v1263 = vmax.f32 %v849, 0.0
  %v1264 = vmax.f32 %v852, 0.0
  %v1265 = vmax.f32 %v857, 0.0
  %v1266 = vmax.f32 %v860, 0.0
  %v1267 = vmax.f32 %v865, 0.0
  %v1268 = vmax.f32 %v868, 0.0
  %v1269 = vmax.f32 %v873, 0.0
  %v1270 = vmax.f32 %v876, 0.0
  %v1271 = vmax.f32 %v881, 0.0
  %v1272 = vmax.f32 %v884, 0.0
  %v1273 = vmax.f32 %v889, 0.0
  %v1274 = vmax.f32 %v892, 0.0
  %v1275 = vmax.f32 %v897, 0.0
  %v1276 = vmax.f32 %v900, 0.0
  %v1277 = vmax.f32 %v905, 0.0
  %v1278 = vmax.f32 %v908, 0.0
  %v1279 = vmax.f32 %v913, 0.0
  %v1280 = vmax.f32 %v916, 0.0
  %v1281 = vmax.f32 %v921, 0.0
  %v1282 = vmax.f32 %v924, 0.0
  %v1283 = vmax.f32 %v929, 0.0
  %v1284 = vmax.f32 %v932, 0.0
  %v1285 = vmax.f32 %v937, 0.0
  %v1286 = vmax.f32 %v940, 0.0
  %v1287 = vmax.f32 %v945, 0.0
  %v1288 = vmax.f32 %v948, 0.0
  %v1289 = vmax.f32 %v953, 0.0
  %v1290 = vmax.f32 %v956, 0.0
  %v1291 = vmax.f32 %v961, 0.0
  %v1292 = vmax.f32 %v964, 0.0
  %v1293 = vmax.f32 %v969, 0.0
  %v1294 = vmax.f32 %v972, 0.0
  %v1295 = vmax.f32 %v977, 0.0
  %v1296 = vmax.f32 %v980, 0.0
  %v1297 = vmax.f32 %v985, 0.0
  %v1298 = vmax.f32 %v988, 0.0
  %v1299 = vmax.f32 %v993, 0.0
  %v1300 = vmax.f32 %v996, 0.0
  %v1301 = vmax.f32 %v1001, 0.0
  %v1302 = vmax.f32 %v1004, 0.0
  %v1303 = vmax.f32 %v1009, 0.0
  %v1304 = vmax.f32 %v1012, 0.0
  %v1305 = vmax.f32 %v1017, 0.0
  %v1306 = vmax.f32 %v1020, 0.0
  %v1307 = vmax.f32 %v1025, 0.0
  %v1308 = vmax.f32 %v1028, 0.0
  %v1309 = vmax.f32 %v1033, 0.0
  %v1310 = vmax.f32 %v1036, 0.0
  %v1311 = vmax.f32 %v1041, 0.0
  %v1312 = vmax.f32 %v1044, 0.0
  %v1313 = vmax.f32 %v1049, 0.0
  %v1314 = vmax.f32 %v1052, 0.0
  %v1315 = vmax.f32 %v1057, 0.0
  %v1316 = vmax.f32 %v1060, 0.0
  %v1317 = vmax.f32 %v1065, 0.0
  %v1318 = vmax.f32 %v1068, 0.0
  %v1319 = vmax.f32 %v1073, 0.0
  %v1320 = vmax.f32 %v1076, 0.0
  %v1321 = vmax.f32 %v1081, 0.0
  %v1322 = vmax.f32 %v1084, 0.0
  %v1323 = vmax.f32 %v1089, 0.0
  %v1324 = vmax.f32 %v1092, 0.0
  %v1325 = vmax.f32 %v1097, 0.0
  %v1326 = vmax.f32 %v1100, 0.0
  %v1327 = vmax.f32 %v1105, 0.0
  %v1328 = vmax.f32 %v1108, 0.0
  %v1329 = vmax.f32 %v1113, 0.0
  %v1330 = vmax.f32 %v1116, 0.0
  %v1331 = vmax.f32 %v1121, 0.0
  %v1332 = vmax.f32 %v1124, 0.0
  %v1333 = vmax.f32 %v1129, 0.0
  %v1334 = vmax.f32 %v1132, 0.0
  %v1335 = vmax.f32 %v1137, 0.0
  %v1336 = vmax.f32 %v1140, 0.0
  %v1337 = vmax.f32 %v1145, 0.0
  %v1338 = vmax.f32 %v1148, 0.0
  %v1339 = vmax.f32 %v1153, 0.0
  %v1340 = vmax.f32 %v1156, 0.0
  %v1341 = vmax.f32 %v1161, 0.0
  %v1342 = vmax.f32 %v1164, 0.0
  %v1343 = vmax.f32 %v1169, 0.0
  %v1344 = vmax.f32 %v1172, 0.0
  %v1345 = vmax.f32 %v1177, 0.0
  %v1346 = vmax.f32 %v1180, 0.0
  %v1347 = vmax.f32 %v1185, 0.0
  %v1348 = vmax.f32 %v1188, 0.0
  %v1349 = vmax.f32 %v1193, 0.0
  %v1350 = vmax.f32 %v1196, 0.0
  %v1351 = vmax.f32 %v1201, 0.0
  %v1352 = vmax.f32 %v1204, 0.0
  %v1353 = vmax.f32 %v1209, 0.0
  %v1354 = vmax.f32 %v1212, 0.0
  %v1355 = vmax.f32 %v1217, 0.0
  %v1356 = vmax.f32 %v1220, 0.0
  %v1357 = vmax.f32 %v1225, 0.0
  %v1358 = vmax.f32 %v1228, 0.0
  %v1359 = vpack.c.bf16 %v1232, %v1231
  %v1360 = vpack.c.bf16 %v1234, %v1233
  %v1361 = vpack.c.bf16 %v1236, %v1235
  %v1362 = vpack.c.bf16 %v1238, %v1237
  %v1363 = vpack.c.bf16 %v1240, %v1239
  %v1364 = vpack.c.bf16 %v1242, %v1241
  %v1365 = vpack.c.bf16 %v1244, %v1243
  %v1366 = vpack.c.bf16 %v1246, %v1245
  %v1367 = vpack.c.bf16 %v1248, %v1247
  %v1368 = vpack.c.bf16 %v1250, %v1249
  %v1369 = vpack.c.bf16 %v1252, %v1251
  %v1370 = vpack.c.bf16 %v1254, %v1253
  %v1371 = vpack.c.bf16 %v1256, %v1255
  %v1372 = vpack.c.bf16 %v1258, %v1257
  %v1373 = vpack.c.bf16 %v1260, %v1259
  %v1374 = vpack.c.bf16 %v1262, %v1261
  %v1375 = vpack.c.bf16 %v1264, %v1263
  %v1376 = vpack.c.bf16 %v1266, %v1265
  %v1377 = vpack.c.bf16 %v1268, %v1267
  %v1378 = vpack.c.bf16 %v1270, %v1269
  %v1379 = vpack.c.bf16 %v1272, %v1271
  %v1380 = vpack.c.bf16 %v1274, %v1273
  %v1381 = vpack.c.bf16 %v1276, %v1275
  %v1382 = vpack.c.bf16 %v1278, %v1277
  %v1383 = vpack.c.bf16 %v1280, %v1279
  %v1384 = vpack.c.bf16 %v1282, %v1281
  %v1385 = vpack.c.bf16 %v1284, %v1283
  %v1386 = vpack.c.bf16 %v1286, %v1285
  %v1387 = vpack.c.bf16 %v1288, %v1287
  %v1388 = vpack.c.bf16 %v1290, %v1289
  %v1389 = vpack.c.bf16 %v1292, %v1291
  %v1390 = vpack.c.bf16 %v1294, %v1293
  %v1391 = vpack.c.bf16 %v1296, %v1295
  %v1392 = vpack.c.bf16 %v1298, %v1297
  %v1393 = vpack.c.bf16 %v1300, %v1299
  %v1394 = vpack.c.bf16 %v1302, %v1301
  %v1395 = vpack.c.bf16 %v1304, %v1303
  %v1396 = vpack.c.bf16 %v1306, %v1305
  %v1397 = vpack.c.bf16 %v1308, %v1307
  %v1398 = vpack.c.bf16 %v1310, %v1309
  %v1399 = vpack.c.bf16 %v1312, %v1311
  %v1400 = vpack.c.bf16 %v1314, %v1313
  %v1401 = vpack.c.bf16 %v1316, %v1315
  %v1402 = vpack.c.bf16 %v1318, %v1317
  %v1403 = vpack.c.bf16 %v1320, %v1319
  %v1404 = vpack.c.bf16 %v1322, %v1321
  %v1405 = vpack.c.bf16 %v1324, %v1323
  %v1406 = vpack.c.bf16 %v1326, %v1325
  %v1407 = vpack.c.bf16 %v1328, %v1327
  %v1408 = vpack.c.bf16 %v1330, %v1329
  %v1409 = vpack.c.bf16 %v1332, %v1331
  %v1410 = vpack.c.bf16 %v1334, %v1333
  %v1411 = vpack.c.bf16 %v1336, %v1335
  %v1412 = vpack.c.bf16 %v1338, %v1337
  %v1413 = vpack.c.bf16 %v1340, %v1339
  %v1414 = vpack.c.bf16 %v1342, %v1341
  %v1415 = vpack.c.bf16 %v1344, %v1343
  %v1416 = vpack.c.bf16 %v1346, %v1345
  %v1417 = vpack.c.bf16 %v1348, %v1347
  %v1418 = vpack.c.bf16 %v1350, %v1349
  %v1419 = vpack.c.bf16 %v1352, %v1351
  %v1420 = vpack.c.bf16 %v1354, %v1353
  %v1421 = vpack.c.bf16 %v1356, %v1355
  %v1422 = vpack.c.bf16 %v1358, %v1357
  %v1423 = vld [vmem:[%s2] sm:$0xff]
  %v1425 = vunpack.c.l.b16 %v1423
  %v1426 = vunpack.c.h.b16 %v1423
  %v1427 = vpack.c.b16 %v1425, %v1425
  %v1428 = vpack.c.b16 %v1426, %v1426
  %1431 = vmatprep.subr.bf16.mxu0 0
  %1432 = vmatpush1.bf16.msra.mxu0 %v1366
  %1433 = vmatprep.subr.bf16.mxu0 0
  %1434 = vmatpush1.bf16.msra.mxu0 %v1365
  %1435 = vmatprep.subr.bf16.mxu0 0
  %1436 = vmatpush1.bf16.msra.mxu0 %v1364
  %1437 = vmatprep.subr.bf16.mxu0 0
  %1438 = vmatpush1.bf16.msra.mxu0 %v1363
  %1439 = vmatprep.subr.bf16.mxu0 0
  %1440 = vmatpush1.bf16.msra.mxu0 %v1362
  %1441 = vmatprep.subr.bf16.mxu0 0
  %1442 = vmatpush1.bf16.msra.mxu0 %v1361
  %1443 = vmatprep.subr.bf16.mxu0 0
  %1444 = vmatpush1.bf16.msra.mxu0 %v1360
  %1445 = vmatprep.subr.bf16.mxu0 0
  %1446 = vmatpush1.bf16.msra.mxu0 %v1359
  %1447 = vmatprep.subr.bf16.mxu0 0
  %1448 = vmatpush2.bf16.msra.mxu0 %v1374
  %1449 = vmatprep.subr.bf16.mxu0 0
  %1450 = vmatpush2.bf16.msra.mxu0 %v1373
  %1451 = vmatprep.subr.bf16.mxu0 0
  %1452 = vmatpush2.bf16.msra.mxu0 %v1372
  %1453 = vmatprep.subr.bf16.mxu0 0
  %1454 = vmatpush2.bf16.msra.mxu0 %v1371
  %1455 = vmatprep.subr.bf16.mxu0 0
  %1456 = vmatpush2.bf16.msra.mxu0 %v1370
  %1457 = vmatprep.subr.bf16.mxu0 0
  %1458 = vmatpush2.bf16.msra.mxu0 %v1369
  %1459 = vmatprep.subr.bf16.mxu0 0
  %1460 = vmatpush2.bf16.msra.mxu0 %v1368
  %1461 = vmatprep.subr.bf16.mxu0 0
  %1462 = vmatpush2.bf16.msra.mxu0 %v1367
  %1463 = vmatprep.mubr.bf16.mxu0 %v1428
  %1464 = vmatmul.mubr.bf16.gmra.mxu0 %v1427
  %v1465 = vpop.f32.mrf.mxu0
  %v1466 = vadd.f32 0.0, %v1465
  %v1467 = vpop.f32.mrf.mxu0
  %v1468 = vpop.f32.mrf.mxu0
  %v1469 = vpop.f32.mrf.mxu0
  %1470 = vdwg.mxu0
  %1471 = vmatprep.subr.bf16.mxu0 0
  %1472 = vmatpush1.bf16.msra.mxu0 %v1382
  %1473 = vmatprep.subr.bf16.mxu0 0
  %1474 = vmatpush1.bf16.msra.mxu0 %v1381
  %1475 = vmatprep.subr.bf16.mxu0 0
  %1476 = vmatpush1.bf16.msra.mxu0 %v1380
  %1477 = vmatprep.subr.bf16.mxu0 0
  %1478 = vmatpush1.bf16.msra.mxu0 %v1379
  %1479 = vmatprep.subr.bf16.mxu0 0
  %1480 = vmatpush1.bf16.msra.mxu0 %v1378
  %1481 = vmatprep.subr.bf16.mxu0 0
  %1482 = vmatpush1.bf16.msra.mxu0 %v1377
  %1483 = vmatprep.subr.bf16.mxu0 0
  %1484 = vmatpush1.bf16.msra.mxu0 %v1376
  %1485 = vmatprep.subr.bf16.mxu0 0
  %1486 = vmatpush1.bf16.msra.mxu0 %v1375
  %1487 = vmatprep.subr.bf16.mxu0 0
  %1488 = vmatpush2.bf16.msra.mxu0 %v1390
  %1489 = vmatprep.subr.bf16.mxu0 0
  %1490 = vmatpush2.bf16.msra.mxu0 %v1389
  %1491 = vmatprep.subr.bf16.mxu0 0
  %1492 = vmatpush2.bf16.msra.mxu0 %v1388
  %1493 = vmatprep.subr.bf16.mxu0 0
  %1494 = vmatpush2.bf16.msra.mxu0 %v1387
  %1495 = vmatprep.subr.bf16.mxu0 0
  %1496 = vmatpush2.bf16.msra.mxu0 %v1386
  %1497 = vmatprep.subr.bf16.mxu0 0
  %1498 = vmatpush2.bf16.msra.mxu0 %v1385
  %1499 = vmatprep.subr.bf16.mxu0 0
  %1500 = vmatpush2.bf16.msra.mxu0 %v1384
  %1501 = vmatprep.subr.bf16.mxu0 0
  %1502 = vmatpush2.bf16.msra.mxu0 %v1383
  %1503 = vmatprep.mubr.bf16.mxu0 %v1428
  %1504 = vmatmul.mubr.bf16.gmra.mxu0 %v1427
  %v1505 = vpop.f32.mrf.mxu0
  %v1506 = vadd.f32 0.0, %v1505
  %v1507 = vpop.f32.mrf.mxu0
  %v1508 = vpop.f32.mrf.mxu0
  %v1509 = vpop.f32.mrf.mxu0
  %1510 = vdwg.mxu0
  %1511 = vmatprep.subr.bf16.mxu0 0
  %1512 = vmatpush1.bf16.msra.mxu0 %v1398
  %1513 = vmatprep.subr.bf16.mxu0 0
  %1514 = vmatpush1.bf16.msra.mxu0 %v1397
  %1515 = vmatprep.subr.bf16.mxu0 0
  %1516 = vmatpush1.bf16.msra.mxu0 %v1396
  %1517 = vmatprep.subr.bf16.mxu0 0
  %1518 = vmatpush1.bf16.msra.mxu0 %v1395
  %1519 = vmatprep.subr.bf16.mxu0 0
  %1520 = vmatpush1.bf16.msra.mxu0 %v1394
  %1521 = vmatprep.subr.bf16.mxu0 0
  %1522 = vmatpush1.bf16.msra.mxu0 %v1393
  %1523 = vmatprep.subr.bf16.mxu0 0
  %1524 = vmatpush1.bf16.msra.mxu0 %v1392
  %1525 = vmatprep.subr.bf16.mxu0 0
  %1526 = vmatpush1.bf16.msra.mxu0 %v1391
  %1527 = vmatprep.subr.bf16.mxu0 0
  %1528 = vmatpush2.bf16.msra.mxu0 %v1406
  %1529 = vmatprep.subr.bf16.mxu0 0
  %1530 = vmatpush2.bf16.msra.mxu0 %v1405
  %1531 = vmatprep.subr.bf16.mxu0 0
  %1532 = vmatpush2.bf16.msra.mxu0 %v1404
  %1533 = vmatprep.subr.bf16.mxu0 0
  %1534 = vmatpush2.bf16.msra.mxu0 %v1403
  %1535 = vmatprep.subr.bf16.mxu0 0
  %1536 = vmatpush2.bf16.msra.mxu0 %v1402
  %1537 = vmatprep.subr.bf16.mxu0 0
  %1538 = vmatpush2.bf16.msra.mxu0 %v1401
  %1539 = vmatprep.subr.bf16.mxu0 0
  %1540 = vmatpush2.bf16.msra.mxu0 %v1400
  %1541 = vmatprep.subr.bf16.mxu0 0
  %1542 = vmatpush2.bf16.msra.mxu0 %v1399
  %1543 = vmatprep.mubr.bf16.mxu0 %v1428
  %1544 = vmatmul.mubr.bf16.gmra.mxu0 %v1427
  %v1545 = vpop.f32.mrf.mxu0
  %v1546 = vadd.f32 0.0, %v1545
  %v1547 = vpop.f32.mrf.mxu0
  %v1548 = vpop.f32.mrf.mxu0
  %v1549 = vpop.f32.mrf.mxu0
  %1550 = vdwg.mxu0
  %1551 = vmatprep.subr.bf16.mxu0 0
  %1552 = vmatpush1.bf16.msra.mxu0 %v1414
  %1553 = vmatprep.subr.bf16.mxu0 0
  %1554 = vmatpush1.bf16.msra.mxu0 %v1413
  %1555 = vmatprep.subr.bf16.mxu0 0
  %1556 = vmatpush1.bf16.msra.mxu0 %v1412
  %1557 = vmatprep.subr.bf16.mxu0 0
  %1558 = vmatpush1.bf16.msra.mxu0 %v1411
  %1559 = vmatprep.subr.bf16.mxu0 0
  %1560 = vmatpush1.bf16.msra.mxu0 %v1410
  %1561 = vmatprep.subr.bf16.mxu0 0
  %1562 = vmatpush1.bf16.msra.mxu0 %v1409
  %1563 = vmatprep.subr.bf16.mxu0 0
  %1564 = vmatpush1.bf16.msra.mxu0 %v1408
  %1565 = vmatprep.subr.bf16.mxu0 0
  %1566 = vmatpush1.bf16.msra.mxu0 %v1407
  %1567 = vmatprep.subr.bf16.mxu0 0
  %1568 = vmatpush2.bf16.msra.mxu0 %v1422
  %1569 = vmatprep.subr.bf16.mxu0 0
  %1570 = vmatpush2.bf16.msra.mxu0 %v1421
  %1571 = vmatprep.subr.bf16.mxu0 0
  %1572 = vmatpush2.bf16.msra.mxu0 %v1420
  %1573 = vmatprep.subr.bf16.mxu0 0
  %1574 = vmatpush2.bf16.msra.mxu0 %v1419
  %1575 = vmatprep.subr.bf16.mxu0 0
  %1576 = vmatpush2.bf16.msra.mxu0 %v1418
  %1577 = vmatprep.subr.bf16.mxu0 0
  %1578 = vmatpush2.bf16.msra.mxu0 %v1417
  %1579 = vmatprep.subr.bf16.mxu0 0
  %1580 = vmatpush2.bf16.msra.mxu0 %v1416
  %1581 = vmatprep.subr.bf16.mxu0 0
  %1582 = vmatpush2.bf16.msra.mxu0 %v1415
  %1583 = vmatprep.mubr.bf16.mxu0 %v1428
  %1584 = vmatmul.mubr.bf16.gmra.mxu0 %v1427
  %v1585 = vpop.f32.mrf.mxu0
  %v1586 = vadd.f32 0.0, %v1585
  %v1587 = vpop.f32.mrf.mxu0
  %v1588 = vpop.f32.mrf.mxu0
  %v1589 = vpop.f32.mrf.mxu0
  %1590 = vdwg.mxu0
  %v1591 = vpack.c.bf16 %v1506, %v1466
  %v1592 = vpack.c.bf16 %v1586, %v1546
  %v1593 = vld [vmem:[%s3] sm:$0xf]
  %v1594 = vld [vmem:[%s3 + $0x4] sm:$0xf]
  %v1595 = vld [vmem:[%s3 + $0x8] sm:$0xf]
  %v1596 = vld [vmem:[%s3 + $0xc] sm:$0xf]
  %v1597 = vld [vmem:[%s3 + $0x10] sm:$0xf]
  %v1598 = vld [vmem:[%s3 + $0x14] sm:$0xf]
  %v1599 = vld [vmem:[%s3 + $0x18] sm:$0xf]
  %v1600 = vld [vmem:[%s3 + $0x1c] sm:$0xf]
  %v1601 = vld [vmem:[%s3 + $0x20] sm:$0xf]
  %v1602 = vld [vmem:[%s3 + $0x24] sm:$0xf]
  %v1603 = vld [vmem:[%s3 + $0x28] sm:$0xf]
  %v1604 = vld [vmem:[%s3 + $0x2c] sm:$0xf]
  %v1605 = vld [vmem:[%s3 + $0x30] sm:$0xf]
  %v1606 = vld [vmem:[%s3 + $0x34] sm:$0xf]
  %v1607 = vld [vmem:[%s3 + $0x38] sm:$0xf]
  %v1608 = vld [vmem:[%s3 + $0x3c] sm:$0xf]
  %v1625 = vunpack.c.l.b16 %v1593
  %v1626 = vunpack.c.l.b16 %v1594
  %v1627 = vunpack.c.l.b16 %v1595
  %v1628 = vunpack.c.l.b16 %v1596
  %v1629 = vunpack.c.l.b16 %v1597
  %v1630 = vunpack.c.l.b16 %v1598
  %v1631 = vunpack.c.l.b16 %v1599
  %v1632 = vunpack.c.l.b16 %v1600
  %v1633 = vunpack.c.l.b16 %v1601
  %v1634 = vunpack.c.l.b16 %v1602
  %v1635 = vunpack.c.l.b16 %v1603
  %v1636 = vunpack.c.l.b16 %v1604
  %v1637 = vunpack.c.l.b16 %v1605
  %v1638 = vunpack.c.l.b16 %v1606
  %v1639 = vunpack.c.l.b16 %v1607
  %v1640 = vunpack.c.l.b16 %v1608
  %v1641 = vpack.c.b16 %v1626, %v1625
  %v1642 = vpack.c.b16 %v1628, %v1627
  %v1643 = vpack.c.b16 %v1630, %v1629
  %v1644 = vpack.c.b16 %v1632, %v1631
  %v1645 = vpack.c.b16 %v1634, %v1633
  %v1646 = vpack.c.b16 %v1636, %v1635
  %v1647 = vpack.c.b16 %v1638, %v1637
  %v1648 = vpack.c.b16 %v1640, %v1639
  %1657 = vmatprep.subr.bf16.mxu0 0
  %1658 = vmatpush1.bf16.msra.mxu0 %v1648
  %1659 = vmatprep.subr.bf16.mxu0 0
  %1660 = vmatpush1.bf16.msra.mxu0 %v1647
  %1661 = vmatprep.subr.bf16.mxu0 0
  %1662 = vmatpush1.bf16.msra.mxu0 %v1646
  %1663 = vmatprep.subr.bf16.mxu0 0
  %1664 = vmatpush1.bf16.msra.mxu0 %v1645
  %1665 = vmatprep.subr.bf16.mxu0 0
  %1666 = vmatpush1.bf16.msra.mxu0 %v1644
  %1667 = vmatprep.subr.bf16.mxu0 0
  %1668 = vmatpush1.bf16.msra.mxu0 %v1643
  %1669 = vmatprep.subr.bf16.mxu0 0
  %1670 = vmatpush1.bf16.msra.mxu0 %v1642
  %1671 = vmatprep.subr.bf16.mxu0 0
  %1672 = vmatpush1.bf16.msra.mxu0 %v1641
  %1673 = vmatprep.subr.bf16.mxu0 0
  %1674 = vmatpush2.bf16.msra.mxu0 0
  %1675 = vmatprep.subr.bf16.mxu0 0
  %1676 = vmatpush2.bf16.msra.mxu0 0
  %1677 = vmatprep.subr.bf16.mxu0 0
  %1678 = vmatpush2.bf16.msra.mxu0 0
  %1679 = vmatprep.subr.bf16.mxu0 0
  %1680 = vmatpush2.bf16.msra.mxu0 0
  %1681 = vmatprep.subr.bf16.mxu0 0
  %1682 = vmatpush2.bf16.msra.mxu0 0
  %1683 = vmatprep.subr.bf16.mxu0 0
  %1684 = vmatpush2.bf16.msra.mxu0 0
  %1685 = vmatprep.subr.bf16.mxu0 0
  %1686 = vmatpush2.bf16.msra.mxu0 0
  %1687 = vmatprep.subr.bf16.mxu0 0
  %1688 = vmatpush2.bf16.msra.mxu0 0
  %1689 = vmatprep.mubr.bf16.mxu0 0
  %1690 = vmatmul.mubr.bf16.gmra.mxu0 %v1591
  %v1691 = vpop.f32.mrf.mxu0
  %v1692 = vadd.f32 0.0, %v1691
  %v1693 = vpop.f32.mrf.mxu0
  %v1694 = vpop.f32.mrf.mxu0
  %v1695 = vadd.f32 0.0, %v1694
  %v1696 = vpop.f32.mrf.mxu0
  %1697 = vmatprep.mubr.bf16.mxu0 0
  %1698 = vmatmul.mubr.bf16.gmra.mxu0 %v1592
  %v1699 = vpop.f32.mrf.mxu0
  %v1700 = vadd.f32 0.0, %v1699
  %v1701 = vpop.f32.mrf.mxu0
  %v1702 = vpop.f32.mrf.mxu0
  %v1703 = vadd.f32 0.0, %v1702
  %v1704 = vpop.f32.mrf.mxu0
  %1705 = vdwg.mxu0
  %1706 = vst [vmem:[%s4] sm:$0xff] %v1692
  %1707 = vst [vmem:[%s4 + $0x8] sm:$0xff] %v1695
  %1708 = vst [vmem:[%s4 + $0x10] sm:$0xff] %v1700
  %1709 = vst [vmem:[%s4 + $0x18] sm:$0xff] %v1703
  // Predicated region
  $region18: #{seqclr_forward.1} parent=0 // pred_check
    _
  $region19: #{seqclr_forward.1} parent=0 // pred_check_branch
    %1711 = sbr.rel (0) target = $region21
  $region20: #{seqclr_forward.1} parent=0 // pred_region
    _
  $region21: #{seqclr_forward.1} parent=0 // pred_fallthru
    _
  // Predicated region
  $region22: #{seqclr_forward.1} parent=0 // pred_check
    _
  $region23: #{seqclr_forward.1} parent=0 // pred_check_branch
    %1713 = sbr.rel (0) target = $region25
  $region24: #{seqclr_forward.1} parent=0 // pred_region
    _
  $region25: #{seqclr_forward.1} parent=0 // pred_fallthru
    _

</llo_original>
